<compile_context>
chip_gen: v5e
topology: v5e:2x2
jax: 0.10.0
libtpu: 0.0.40
codegen_flags: <defaults>
</compile_context>

<pallas_src>
import functools

import jax
import jax.numpy as jnp
from jax.experimental import pallas as pl
from jax.experimental.pallas import tpu as pltpu


def _mlp_kernel(x_ref, w1_ref, b1_ref, w2_ref, b2_ref, w3_ref, b3_ref, o_ref):
    """Fused forward pass for one (folded) batch tile.

    Matmul operands are bf16 (MXU fast path); accumulation, bias add and
    sigmoid stay f32 (v5e has no bf16 VPU/EUP path).  The f32 -> bf16 cast of
    x happens here, not in the wrapper.
    """
    x = x_ref[...].astype(jnp.bfloat16)
    h1 = jnp.dot(x, w1_ref[...], preferred_element_type=jnp.float32) + b1_ref[...]
    h1 = jax.nn.sigmoid(h1)
    h2 = (
        jnp.dot(h1.astype(jnp.bfloat16), w2_ref[...],
                preferred_element_type=jnp.float32)
        + b2_ref[...]
    )
    h2 = jax.nn.sigmoid(h2)
    out = (
        jnp.dot(h2.astype(jnp.bfloat16), w3_ref[...],
                preferred_element_type=jnp.float32)
        + b3_ref[...]
    )
    o_ref[...] = out.astype(o_ref.dtype)


def _fold_factor(num_classes, batch):
    """Rows folded per lane-dense output row (power of two, divides batch)."""
    if num_classes <= 128 and 128 % num_classes == 0:
        f = 128 // num_classes
    else:
        f = 1
    while f > 1 and batch % f:
        f //= 2
    return f


def _lift_weight(w, f):
    """bf16 block-diagonal lift kron(I_f, W): exact, lane-dense matmuls."""
    w = w.astype(jnp.bfloat16)
    if f == 1:
        return w
    return jnp.kron(jnp.eye(f, dtype=w.dtype), w)


def _lift_bias(b, f):
    b = b.astype(jnp.float32).reshape(1, -1)
    if f == 1:
        return b
    return jnp.tile(b, (1, f))


@functools.partial(jax.jit, static_argnames=("batch_tile",))
def simple_mlp_forward(x, w1, b1, w2, b2, w3, b3, *, batch_tile=1024):
    """x: [B, input_dim] float32.  Returns logits [B, num_classes] float32."""
    B, input_dim = x.shape
    hidden1_dim = w1.shape[1]
    hidden2_dim = w2.shape[1]
    num_classes = w3.shape[1]

    # ---- fold factor: pack f batch rows per lane-dense row ------------------
    f = _fold_factor(num_classes, B)
    Bf = B // f
    in_f, h1_f, h2_f, nc_f = (f * input_dim, f * hidden1_dim,
                              f * hidden2_dim, f * num_classes)

    # Free row-major relayouts: x[b, d] == xf[b // f, (b % f) * input_dim + d].
    xf = x.reshape(Bf, in_f)
    w1f, b1f = _lift_weight(w1, f), _lift_bias(b1, f)
    w2f, b2f = _lift_weight(w2, f), _lift_bias(b2, f)
    w3f, b3f = _lift_weight(w3, f), _lift_bias(b3, f)

    # ---- tile selection ------------------------------------------------------
    # One big tile when it fits (single-TC chips: grid steps are serial
    # overhead).  Otherwise ~batch_tile original rows per step; second-minor
    # block dim must be a multiple of 8 unless it equals the full array dim.
    rows_per_step = max(1, batch_tile // f)
    if rows_per_step >= Bf:
        tile_f = Bf
    else:
        tile_f = max(8, (rows_per_step // 8) * 8)
    grid = (pl.cdiv(Bf, tile_f),)

    def full_spec(shape):
        # Grid-invariant block (index_map always (0, 0)): fetched once.
        return pl.BlockSpec(shape, lambda i: (0, 0))

    out_f = pl.pallas_call(
        _mlp_kernel,
        out_shape=jax.ShapeDtypeStruct((Bf, nc_f), jnp.float32),
        grid_spec=pl.GridSpec(
            grid=grid,
            in_specs=[
                pl.BlockSpec((tile_f, in_f), lambda i: (i, 0)),  # x (f32)
                full_spec((in_f, h1_f)),                          # W1 (bf16)
                full_spec((1, h1_f)),                             # b1 (f32)
                full_spec((h1_f, h2_f)),                          # W2 (bf16)
                full_spec((1, h2_f)),                             # b2 (f32)
                full_spec((h2_f, nc_f)),                          # W3 (bf16)
                full_spec((1, nc_f)),                             # b3 (f32)
            ],
            out_specs=pl.BlockSpec((tile_f, nc_f), lambda i: (i, 0)),
        ),
        compiler_params=pltpu.CompilerParams(
            dimension_semantics=("parallel",),
        ),
    )(xf, w1f, b1f, w2f, b2f, w3f, b3f)

    # Free unfold back to [B, num_classes].
    return out_f.reshape(B, num_classes)


def init_params(key, input_dim, hidden1_dim, hidden2_dim, num_classes):
    """Parameter init mirroring SimpleMLP.__init__.

    hidden1 / hidden2 weights: Xavier-normal (as in the PyTorch module).
    output weight + all biases: PyTorch-default uniform(-1/sqrt(fan_in), +).
    Weights are returned already transposed to [in, out], in f32.
    """
    k1, k2, k3, kb1, kb2, kb3 = jax.random.split(key, 6)

    def xavier_normal(k, fan_in, fan_out):
        std = jnp.sqrt(2.0 / (fan_in + fan_out))
        return std * jax.random.normal(k, (fan_in, fan_out), dtype=jnp.float32)

    def default_uniform(k, shape, fan_in):
        bound = 1.0 / jnp.sqrt(float(fan_in))
        return jax.random.uniform(
            k, shape, dtype=jnp.float32, minval=-bound, maxval=bound)

    w1 = xavier_normal(k1, input_dim, hidden1_dim)
    b1 = default_uniform(kb1, (1, hidden1_dim), input_dim)
    w2 = xavier_normal(k2, hidden1_dim, hidden2_dim)
    b2 = default_uniform(kb2, (1, hidden2_dim), hidden1_dim)
    w3 = default_uniform(k3, (hidden2_dim, num_classes), hidden2_dim)
    b3 = default_uniform(kb3, (1, num_classes), hidden2_dim)
    return w1, b1, w2, b2, w3, b3


def _ref_f32(x, w1, b1, w2, b2, w3, b3):
    h1 = jax.nn.sigmoid(x @ w1 + b1)
    h2 = jax.nn.sigmoid(h1 @ w2 + b2)
    return h2 @ w3 + b3


def _ref_bf16(x, w1, b1, w2, b2, w3, b3):
    h1 = jax.nn.sigmoid(
        jnp.dot(x.astype(jnp.bfloat16), w1.astype(jnp.bfloat16),
                preferred_element_type=jnp.float32) + b1)
    h2 = jax.nn.sigmoid(
        jnp.dot(h1.astype(jnp.bfloat16), w2.astype(jnp.bfloat16),
                preferred_element_type=jnp.float32) + b2)
    return jnp.dot(h2.astype(jnp.bfloat16), w3.astype(jnp.bfloat16),
                   preferred_element_type=jnp.float32) + b3


if __name__ == "__main__":
    key = jax.random.PRNGKey(0)

    # --- main case: lane-dense fold (num_classes=16 -> fold factor 8) --------
    batch, input_dim, hidden1_dim, hidden2_dim, num_classes = 256, 32, 64, 32, 16
    kx, kp = jax.random.split(key)
    x = jax.random.normal(kx, (batch, input_dim), dtype=jnp.float32)
    params = init_params(kp, input_dim, hidden1_dim, hidden2_dim, num_classes)

    out = simple_mlp_forward(x, *params)
    jax.block_until_ready(out)
    assert out.shape == (batch, num_classes)
    assert out.dtype == jnp.float32

    ref_b = _ref_bf16(x, *params)
    assert jnp.allclose(out, ref_b, atol=1e-3, rtol=1e-3), (
        float(jnp.max(jnp.abs(out - ref_b))))
    ref_f = _ref_f32(x, *params)
    assert jnp.allclose(out, ref_f, atol=2e-2, rtol=2e-2), (
        float(jnp.max(jnp.abs(out - ref_f))))

    # --- fallback case: num_classes=10 (no fold), batch not multiple of 8 ----
    kx2, kp2 = jax.random.split(kx)
    x2 = jax.random.normal(kx2, (100, input_dim), dtype=jnp.float32)
    params2 = init_params(kp2, input_dim, hidden1_dim, hidden2_dim, 10)
    out2 = simple_mlp_forward(x2, *params2)
    jax.block_until_ready(out2)
    assert out2.shape == (100, 10)
    ref2 = _ref_f32(x2, *params2)
    assert jnp.allclose(out2, ref2, atol=2e-2, rtol=2e-2), (
        float(jnp.max(jnp.abs(out2 - ref2))))

    # --- gridded case: small batch_tile forces multiple steps + ragged block -
    kx3, _ = jax.random.split(kx2)
    x3 = jax.random.normal(kx3, (200, input_dim), dtype=jnp.float32)
    out3 = simple_mlp_forward(x3, *params, batch_tile=64)
    jax.block_until_ready(out3)
    assert out3.shape == (200, num_classes)
    ref3 = _ref_f32(x3, *params)
    assert jnp.allclose(out3, ref3, atol=2e-2, rtol=2e-2), (
        float(jnp.max(jnp.abs(out3 - ref3))))

    print("KERNEL_OK")
</pallas_src>

<mosaic_0001>
module attributes {stable_mosaic.version = 11 : i64} {
  func.func @_mlp_kernel(%arg0: i32, %arg1: memref<32x256xf32, #tpu.memory_space<vmem>>, %arg2: memref<256x512xbf16, #tpu.memory_space<vmem>>, %arg3: memref<1x512xf32, #tpu.memory_space<vmem>>, %arg4: memref<512x256xbf16, #tpu.memory_space<vmem>>, %arg5: memref<1x256xf32, #tpu.memory_space<vmem>>, %arg6: memref<256x128xbf16, #tpu.memory_space<vmem>>, %arg7: memref<1x128xf32, #tpu.memory_space<vmem>>, %arg8: memref<32x128xf32, #tpu.memory_space<vmem>>) attributes {dimension_semantics = [#tpu.dimension_semantics<parallel>], iteration_bounds = array<i64: 1>, scalar_prefetch = 0 : i64, scratch_operands = 0 : i64, tpu.core_type = #tpu.core_type<tc>, window_params = [{transform_indices = @transform_0, window_bounds = array<i64: 32, 256>}, {pipeline_mode = #tpu.pipeline_mode<synchronous>, transform_indices = @transform_1, window_bounds = array<i64: 256, 512>}, {pipeline_mode = #tpu.pipeline_mode<synchronous>, transform_indices = @transform_2, window_bounds = array<i64: 1, 512>}, {pipeline_mode = #tpu.pipeline_mode<synchronous>, transform_indices = @transform_3, window_bounds = array<i64: 512, 256>}, {pipeline_mode = #tpu.pipeline_mode<synchronous>, transform_indices = @transform_4, window_bounds = array<i64: 1, 256>}, {pipeline_mode = #tpu.pipeline_mode<synchronous>, transform_indices = @transform_5, window_bounds = array<i64: 256, 128>}, {pipeline_mode = #tpu.pipeline_mode<synchronous>, transform_indices = @transform_6, window_bounds = array<i64: 1, 128>}, {transform_indices = @transform_7, window_bounds = array<i64: 32, 128>}]} {
    %c0 = arith.constant 0 : index
    %c0_0 = arith.constant 0 : index
    %0 = vector.load %arg1[%c0, %c0_0] : memref<32x256xf32, #tpu.memory_space<vmem>>, vector<32x256xf32>
    %1 = arith.truncf %0 : vector<32x256xf32> to vector<32x256xbf16>
    %c0_1 = arith.constant 0 : index
    %c0_2 = arith.constant 0 : index
    %2 = vector.load %arg2[%c0_1, %c0_2] : memref<256x512xbf16, #tpu.memory_space<vmem>>, vector<256x512xbf16>
    %cst = arith.constant dense<0.000000e+00> : vector<32x512xf32>
    %3 = tpu.matmul %1, %2, %cst {dimension_numbers = #tpu.dot_dimension_numbers<[1], [0], [0], [1], [0, 0, 1, 1], [], []>} : vector<32x256xbf16>, vector<256x512xbf16>, vector<32x512xf32> -> vector<32x512xf32>
    %c0_3 = arith.constant 0 : index
    %c0_4 = arith.constant 0 : index
    %4 = vector.load %arg3[%c0_3, %c0_4] : memref<1x512xf32, #tpu.memory_space<vmem>>, vector<1x512xf32>
    %5 = vector.broadcast %4 : vector<1x512xf32> to vector<32x512xf32>
    %6 = arith.addf %3, %5 : vector<32x512xf32>
    %7 = arith.negf %6 : vector<32x512xf32>
    %8 = math.exp %7 : vector<32x512xf32>
    %cst_5 = arith.constant 1.000000e+00 : f32
    %9 = vector.broadcast %cst_5 : f32 to vector<32x512xf32>
    %10 = arith.addf %9, %8 : vector<32x512xf32>
    %11 = arith.divf %9, %10 : vector<32x512xf32>
    %12 = arith.truncf %11 : vector<32x512xf32> to vector<32x512xbf16>
    %c0_6 = arith.constant 0 : index
    %c0_7 = arith.constant 0 : index
    %13 = vector.load %arg4[%c0_6, %c0_7] : memref<512x256xbf16, #tpu.memory_space<vmem>>, vector<512x256xbf16>
    %cst_8 = arith.constant dense<0.000000e+00> : vector<32x256xf32>
    %14 = tpu.matmul %12, %13, %cst_8 {dimension_numbers = #tpu.dot_dimension_numbers<[1], [0], [0], [1], [0, 0, 1, 1], [], []>} : vector<32x512xbf16>, vector<512x256xbf16>, vector<32x256xf32> -> vector<32x256xf32>
    %c0_9 = arith.constant 0 : index
    %c0_10 = arith.constant 0 : index
    %15 = vector.load %arg5[%c0_9, %c0_10] : memref<1x256xf32, #tpu.memory_space<vmem>>, vector<1x256xf32>
    %16 = vector.broadcast %15 : vector<1x256xf32> to vector<32x256xf32>
    %17 = arith.addf %14, %16 : vector<32x256xf32>
    %18 = arith.negf %17 : vector<32x256xf32>
    %19 = math.exp %18 : vector<32x256xf32>
    %cst_11 = arith.constant 1.000000e+00 : f32
    %20 = vector.broadcast %cst_11 : f32 to vector<32x256xf32>
    %21 = arith.addf %20, %19 : vector<32x256xf32>
    %22 = arith.divf %20, %21 : vector<32x256xf32>
    %23 = arith.truncf %22 : vector<32x256xf32> to vector<32x256xbf16>
    %c0_12 = arith.constant 0 : index
    %c0_13 = arith.constant 0 : index
    %24 = vector.load %arg6[%c0_12, %c0_13] : memref<256x128xbf16, #tpu.memory_space<vmem>>, vector<256x128xbf16>
    %cst_14 = arith.constant dense<0.000000e+00> : vector<32x128xf32>
    %25 = tpu.matmul %23, %24, %cst_14 {dimension_numbers = #tpu.dot_dimension_numbers<[1], [0], [0], [1], [0, 0, 1, 1], [], []>} : vector<32x256xbf16>, vector<256x128xbf16>, vector<32x128xf32> -> vector<32x128xf32>
    %c0_15 = arith.constant 0 : index
    %c0_16 = arith.constant 0 : index
    %26 = vector.load %arg7[%c0_15, %c0_16] : memref<1x128xf32, #tpu.memory_space<vmem>>, vector<1x128xf32>
    %27 = vector.broadcast %26 : vector<1x128xf32> to vector<32x128xf32>
    %28 = arith.addf %25, %27 : vector<32x128xf32>
    %c0_17 = arith.constant 0 : index
    %c0_18 = arith.constant 0 : index
    %29 = vector.load %arg8[%c0_17, %c0_18] : memref<32x128xf32, #tpu.memory_space<vmem>>, vector<32x128xf32>
    tpu.vector_store %arg8[%c0_17, %c0_18], %28 {strides = array<i32>} : memref<32x128xf32, #tpu.memory_space<vmem>>, vector<32x128xf32>,
    return
  }
  func.func @transform_0(%arg0: i32) -> (i32, i32) {
    %c0_i32 = arith.constant 0 : i32
    %c0_i32_0 = arith.constant 0 : i32
    return %arg0, %c0_i32 : i32, i32
  }
  func.func @transform_1(%arg0: i32) -> (i32, i32) {
    %c0_i32 = arith.constant 0 : i32
    %c0_i32_0 = arith.constant 0 : i32
    %c0_i32_1 = arith.constant 0 : i32
    return %c0_i32, %c0_i32_0 : i32, i32
  }
  func.func @transform_2(%arg0: i32) -> (i32, i32) {
    %c0_i32 = arith.constant 0 : i32
    %c0_i32_0 = arith.constant 0 : i32
    %c0_i32_1 = arith.constant 0 : i32
    return %c0_i32, %c0_i32_0 : i32, i32
  }
  func.func @transform_3(%arg0: i32) -> (i32, i32) {
    %c0_i32 = arith.constant 0 : i32
    %c0_i32_0 = arith.constant 0 : i32
    %c0_i32_1 = arith.constant 0 : i32
    return %c0_i32, %c0_i32_0 : i32, i32
  }
  func.func @transform_4(%arg0: i32) -> (i32, i32) {
    %c0_i32 = arith.constant 0 : i32
    %c0_i32_0 = arith.constant 0 : i32
    %c0_i32_1 = arith.constant 0 : i32
    return %c0_i32, %c0_i32_0 : i32, i32
  }
  func.func @transform_5(%arg0: i32) -> (i32, i32) {
    %c0_i32 = arith.constant 0 : i32
    %c0_i32_0 = arith.constant 0 : i32
    %c0_i32_1 = arith.constant 0 : i32
    return %c0_i32, %c0_i32_0 : i32, i32
  }
  func.func @transform_6(%arg0: i32) -> (i32, i32) {
    %c0_i32 = arith.constant 0 : i32
    %c0_i32_0 = arith.constant 0 : i32
    %c0_i32_1 = arith.constant 0 : i32
    return %c0_i32, %c0_i32_0 : i32, i32
  }
  func.func @transform_7(%arg0: i32) -> (i32, i32) {
    %c0_i32 = arith.constant 0 : i32
    %c0_i32_0 = arith.constant 0 : i32
    return %arg0, %c0_i32 : i32, i32
  }
}

</mosaic_0001>

<llo_original>
// kernel: simple_mlp_forward.1
$region0: #{simple_mlp_forward.1}
  #allocation0 [shape = 'u32[]', space=smem, size = 0x4, offset = 0x4, fixed_abs, tag = 'smem constant byte address 0x4 - core index']
  #allocation1 [shape = 'u32[72,128]{1,0:T(1,128)}', space=vmem, size = 0x9000, scoped, tag = 'internal scratch']
  %s0 = inlined_call_operand.vmem [shape: f32[32,256], index: 0, kind: input, shape index: {}]
  %s1 = inlined_call_operand.vmem [shape: bf16[256,512], index: 1, kind: input, shape index: {}]
  %s2 = inlined_call_operand.vmem [shape: f32[1,512], index: 2, kind: input, shape index: {}]
  %s3 = inlined_call_operand.vmem [shape: bf16[512,256], index: 3, kind: input, shape index: {}]
  %s4 = inlined_call_operand.vmem [shape: f32[1,256], index: 4, kind: input, shape index: {}]
  %s5 = inlined_call_operand.vmem [shape: bf16[256,128], index: 5, kind: input, shape index: {}]
  %s6 = inlined_call_operand.vmem [shape: f32[1,128], index: 6, kind: input, shape index: {}]
  %s7 = inlined_call_operand.vmem [shape: f32[32,128], index: 7, kind: output, shape index: {}]
  %s8 = sld [smem:[#allocation0]]
  $region38: #{simple_mlp_forward.1} parent=0
    _
  %s10 = ssub.s32 1, %s8
  %s11 = scalar_select 0, %s10, %s8
  // Predicated region
  $region2: #{simple_mlp_forward.1} parent=0 // pred_check
    _
  $region3: #{simple_mlp_forward.1} parent=0 // pred_check_branch
    %13 = sbr.rel (0) target = $region5
  $region4: #{simple_mlp_forward.1} parent=0 // pred_region
    _
  $region5: #{simple_mlp_forward.1} parent=0 // pred_fallthru
    _
  // Predicated region
  $region6: #{simple_mlp_forward.1} parent=0 // pred_check
    _
  $region7: #{simple_mlp_forward.1} parent=0 // pred_check_branch
    %15 = sbr.rel (0) target = $region9
  $region8: #{simple_mlp_forward.1} parent=0 // pred_region
    _
  $region9: #{simple_mlp_forward.1} parent=0 // pred_fallthru
    _
  // Predicated region
  $region10: #{simple_mlp_forward.1} parent=0 // pred_check
    _
  $region11: #{simple_mlp_forward.1} parent=0 // pred_check_branch
    %17 = sbr.rel (0) target = $region13
  $region12: #{simple_mlp_forward.1} parent=0 // pred_region
    _
  $region13: #{simple_mlp_forward.1} parent=0 // pred_fallthru
    _
  // Predicated region
  $region14: #{simple_mlp_forward.1} parent=0 // pred_check
    _
  $region15: #{simple_mlp_forward.1} parent=0 // pred_check_branch
    %19 = sbr.rel (0) target = $region17
  $region16: #{simple_mlp_forward.1} parent=0 // pred_region
    _
  $region17: #{simple_mlp_forward.1} parent=0 // pred_fallthru
    _
  // Predicated region
  $region18: #{simple_mlp_forward.1} parent=0 // pred_check
    _
  $region19: #{simple_mlp_forward.1} parent=0 // pred_check_branch
    %21 = sbr.rel (0) target = $region21
  $region20: #{simple_mlp_forward.1} parent=0 // pred_region
    _
  $region21: #{simple_mlp_forward.1} parent=0 // pred_fallthru
    _
  // Predicated region
  $region22: #{simple_mlp_forward.1} parent=0 // pred_check
    _
  $region23: #{simple_mlp_forward.1} parent=0 // pred_check_branch
    %23 = sbr.rel (0) target = $region25
  $region24: #{simple_mlp_forward.1} parent=0 // pred_region
    _
  $region25: #{simple_mlp_forward.1} parent=0 // pred_fallthru
    _
  // Predicated region
  $region26: #{simple_mlp_forward.1} parent=0 // pred_check
    _
  $region27: #{simple_mlp_forward.1} parent=0 // pred_check_branch
    %25 = sbr.rel (0) target = $region29
  $region28: #{simple_mlp_forward.1} parent=0 // pred_region
    _
  $region29: #{simple_mlp_forward.1} parent=0 // pred_fallthru
    _
  %v26 = vld [vmem:[%s0] sm:$0xff]
  %v27 = vld [vmem:[%s0 + $0x8] sm:$0xff]
  %v28 = vld [vmem:[%s0 + $0x10] sm:$0xff]
  %v29 = vld [vmem:[%s0 + $0x18] sm:$0xff]
  %v30 = vld [vmem:[%s0 + $0x20] sm:$0xff]
  %v31 = vld [vmem:[%s0 + $0x28] sm:$0xff]
  %v32 = vld [vmem:[%s0 + $0x30] sm:$0xff]
  %v33 = vld [vmem:[%s0 + $0x38] sm:$0xff]
  %v34 = vpack.c.bf16 %v28, %v26
  %v35 = vpack.c.bf16 %v29, %v27
  %v36 = vpack.c.bf16 %v32, %v30
  %v37 = vpack.c.bf16 %v33, %v31
  %v38 = vld [vmem:[%s1] sm:$0xff]
  %v39 = vld [vmem:[%s1 + $0x8] sm:$0xff]
  %v40 = vld [vmem:[%s1 + $0x10] sm:$0xff]
  %v41 = vld [vmem:[%s1 + $0x18] sm:$0xff]
  %v42 = vld [vmem:[%s1 + $0x20] sm:$0xff]
  %v43 = vld [vmem:[%s1 + $0x28] sm:$0xff]
  %v44 = vld [vmem:[%s1 + $0x30] sm:$0xff]
  %v45 = vld [vmem:[%s1 + $0x38] sm:$0xff]
  %v46 = vld [vmem:[%s1 + $0x40] sm:$0xff]
  %v47 = vld [vmem:[%s1 + $0x48] sm:$0xff]
  %v48 = vld [vmem:[%s1 + $0x50] sm:$0xff]
  %v49 = vld [vmem:[%s1 + $0x58] sm:$0xff]
  %v50 = vld [vmem:[%s1 + $0x60] sm:$0xff]
  %v51 = vld [vmem:[%s1 + $0x68] sm:$0xff]
  %v52 = vld [vmem:[%s1 + $0x70] sm:$0xff]
  %v53 = vld [vmem:[%s1 + $0x78] sm:$0xff]
  %v54 = vld [vmem:[%s1 + $0x80] sm:$0xff]
  %v55 = vld [vmem:[%s1 + $0x88] sm:$0xff]
  %v56 = vld [vmem:[%s1 + $0x90] sm:$0xff]
  %v57 = vld [vmem:[%s1 + $0x98] sm:$0xff]
  %v58 = vld [vmem:[%s1 + $0xa0] sm:$0xff]
  %v59 = vld [vmem:[%s1 + $0xa8] sm:$0xff]
  %v60 = vld [vmem:[%s1 + $0xb0] sm:$0xff]
  %v61 = vld [vmem:[%s1 + $0xb8] sm:$0xff]
  %v62 = vld [vmem:[%s1 + $0xc0] sm:$0xff]
  %v63 = vld [vmem:[%s1 + $0xc8] sm:$0xff]
  %v64 = vld [vmem:[%s1 + $0xd0] sm:$0xff]
  %v65 = vld [vmem:[%s1 + $0xd8] sm:$0xff]
  %v66 = vld [vmem:[%s1 + $0xe0] sm:$0xff]
  %v67 = vld [vmem:[%s1 + $0xe8] sm:$0xff]
  %v68 = vld [vmem:[%s1 + $0xf0] sm:$0xff]
  %v69 = vld [vmem:[%s1 + $0xf8] sm:$0xff]
  %v70 = vld [vmem:[%s1 + $0x100] sm:$0xff]
  %v71 = vld [vmem:[%s1 + $0x108] sm:$0xff]
  %v72 = vld [vmem:[%s1 + $0x110] sm:$0xff]
  %v73 = vld [vmem:[%s1 + $0x118] sm:$0xff]
  %v74 = vld [vmem:[%s1 + $0x120] sm:$0xff]
  %v75 = vld [vmem:[%s1 + $0x128] sm:$0xff]
  %v76 = vld [vmem:[%s1 + $0x130] sm:$0xff]
  %v77 = vld [vmem:[%s1 + $0x138] sm:$0xff]
  %v78 = vld [vmem:[%s1 + $0x140] sm:$0xff]
  %v79 = vld [vmem:[%s1 + $0x148] sm:$0xff]
  %v80 = vld [vmem:[%s1 + $0x150] sm:$0xff]
  %v81 = vld [vmem:[%s1 + $0x158] sm:$0xff]
  %v82 = vld [vmem:[%s1 + $0x160] sm:$0xff]
  %v83 = vld [vmem:[%s1 + $0x168] sm:$0xff]
  %v84 = vld [vmem:[%s1 + $0x170] sm:$0xff]
  %v85 = vld [vmem:[%s1 + $0x178] sm:$0xff]
  %v86 = vld [vmem:[%s1 + $0x180] sm:$0xff]
  %v87 = vld [vmem:[%s1 + $0x188] sm:$0xff]
  %v88 = vld [vmem:[%s1 + $0x190] sm:$0xff]
  %v89 = vld [vmem:[%s1 + $0x198] sm:$0xff]
  %v90 = vld [vmem:[%s1 + $0x1a0] sm:$0xff]
  %v91 = vld [vmem:[%s1 + $0x1a8] sm:$0xff]
  %v92 = vld [vmem:[%s1 + $0x1b0] sm:$0xff]
  %v93 = vld [vmem:[%s1 + $0x1b8] sm:$0xff]
  %v94 = vld [vmem:[%s1 + $0x1c0] sm:$0xff]
  %v95 = vld [vmem:[%s1 + $0x1c8] sm:$0xff]
  %v96 = vld [vmem:[%s1 + $0x1d0] sm:$0xff]
  %v97 = vld [vmem:[%s1 + $0x1d8] sm:$0xff]
  %v98 = vld [vmem:[%s1 + $0x1e0] sm:$0xff]
  %v99 = vld [vmem:[%s1 + $0x1e8] sm:$0xff]
  %v100 = vld [vmem:[%s1 + $0x1f0] sm:$0xff]
  %v101 = vld [vmem:[%s1 + $0x1f8] sm:$0xff]
  %v102 = vld [vmem:[%s2] sm:$0xf]
  %v104 = vperm.slane %v102, 0
  %v105 = vperm.slane %v102, 1
  %v106 = vperm.slane %v102, 2
  %v107 = vperm.slane %v102, 3
  %v176 = vunpack.c.l.b16 %v38
  %v177 = vunpack.c.h.b16 %v38
  %v178 = vunpack.c.l.b16 %v39
  %v179 = vunpack.c.h.b16 %v39
  %v180 = vunpack.c.l.b16 %v40
  %v181 = vunpack.c.h.b16 %v40
  %v182 = vunpack.c.l.b16 %v41
  %v183 = vunpack.c.h.b16 %v41
  %v184 = vunpack.c.l.b16 %v42
  %v185 = vunpack.c.h.b16 %v42
  %v186 = vunpack.c.l.b16 %v43
  %v187 = vunpack.c.h.b16 %v43
  %v188 = vunpack.c.l.b16 %v44
  %v189 = vunpack.c.h.b16 %v44
  %v190 = vunpack.c.l.b16 %v45
  %v191 = vunpack.c.h.b16 %v45
  %v192 = vunpack.c.l.b16 %v46
  %v193 = vunpack.c.h.b16 %v46
  %v194 = vunpack.c.l.b16 %v47
  %v195 = vunpack.c.h.b16 %v47
  %v196 = vunpack.c.l.b16 %v48
  %v197 = vunpack.c.h.b16 %v48
  %v198 = vunpack.c.l.b16 %v49
  %v199 = vunpack.c.h.b16 %v49
  %v200 = vunpack.c.l.b16 %v50
  %v201 = vunpack.c.h.b16 %v50
  %v202 = vunpack.c.l.b16 %v51
  %v203 = vunpack.c.h.b16 %v51
  %v204 = vunpack.c.l.b16 %v52
  %v205 = vunpack.c.h.b16 %v52
  %v206 = vunpack.c.l.b16 %v53
  %v207 = vunpack.c.h.b16 %v53
  %v208 = vunpack.c.l.b16 %v54
  %v209 = vunpack.c.h.b16 %v54
  %v210 = vunpack.c.l.b16 %v55
  %v211 = vunpack.c.h.b16 %v55
  %v212 = vunpack.c.l.b16 %v56
  %v213 = vunpack.c.h.b16 %v56
  %v214 = vunpack.c.l.b16 %v57
  %v215 = vunpack.c.h.b16 %v57
  %v216 = vunpack.c.l.b16 %v58
  %v217 = vunpack.c.h.b16 %v58
  %v218 = vunpack.c.l.b16 %v59
  %v219 = vunpack.c.h.b16 %v59
  %v220 = vunpack.c.l.b16 %v60
  %v221 = vunpack.c.h.b16 %v60
  %v222 = vunpack.c.l.b16 %v61
  %v223 = vunpack.c.h.b16 %v61
  %v224 = vunpack.c.l.b16 %v62
  %v225 = vunpack.c.h.b16 %v62
  %v226 = vunpack.c.l.b16 %v63
  %v227 = vunpack.c.h.b16 %v63
  %v228 = vunpack.c.l.b16 %v64
  %v229 = vunpack.c.h.b16 %v64
  %v230 = vunpack.c.l.b16 %v65
  %v231 = vunpack.c.h.b16 %v65
  %v232 = vunpack.c.l.b16 %v66
  %v233 = vunpack.c.h.b16 %v66
  %v234 = vunpack.c.l.b16 %v67
  %v235 = vunpack.c.h.b16 %v67
  %v236 = vunpack.c.l.b16 %v68
  %v237 = vunpack.c.h.b16 %v68
  %v238 = vunpack.c.l.b16 %v69
  %v239 = vunpack.c.h.b16 %v69
  %v240 = vunpack.c.l.b16 %v70
  %v241 = vunpack.c.h.b16 %v70
  %v242 = vunpack.c.l.b16 %v71
  %v243 = vunpack.c.h.b16 %v71
  %v244 = vunpack.c.l.b16 %v72
  %v245 = vunpack.c.h.b16 %v72
  %v246 = vunpack.c.l.b16 %v73
  %v247 = vunpack.c.h.b16 %v73
  %v248 = vunpack.c.l.b16 %v74
  %v249 = vunpack.c.h.b16 %v74
  %v250 = vunpack.c.l.b16 %v75
  %v251 = vunpack.c.h.b16 %v75
  %v252 = vunpack.c.l.b16 %v76
  %v253 = vunpack.c.h.b16 %v76
  %v254 = vunpack.c.l.b16 %v77
  %v255 = vunpack.c.h.b16 %v77
  %v256 = vunpack.c.l.b16 %v78
  %v257 = vunpack.c.h.b16 %v78
  %v258 = vunpack.c.l.b16 %v79
  %v259 = vunpack.c.h.b16 %v79
  %v260 = vunpack.c.l.b16 %v80
  %v261 = vunpack.c.h.b16 %v80
  %v262 = vunpack.c.l.b16 %v81
  %v263 = vunpack.c.h.b16 %v81
  %v264 = vunpack.c.l.b16 %v82
  %v265 = vunpack.c.h.b16 %v82
  %v266 = vunpack.c.l.b16 %v83
  %v267 = vunpack.c.h.b16 %v83
  %v268 = vunpack.c.l.b16 %v84
  %v269 = vunpack.c.h.b16 %v84
  %v270 = vunpack.c.l.b16 %v85
  %v271 = vunpack.c.h.b16 %v85
  %v272 = vunpack.c.l.b16 %v86
  %v273 = vunpack.c.h.b16 %v86
  %v274 = vunpack.c.l.b16 %v87
  %v275 = vunpack.c.h.b16 %v87
  %v276 = vunpack.c.l.b16 %v88
  %v277 = vunpack.c.h.b16 %v88
  %v278 = vunpack.c.l.b16 %v89
  %v279 = vunpack.c.h.b16 %v89
  %v280 = vunpack.c.l.b16 %v90
  %v281 = vunpack.c.h.b16 %v90
  %v282 = vunpack.c.l.b16 %v91
  %v283 = vunpack.c.h.b16 %v91
  %v284 = vunpack.c.l.b16 %v92
  %v285 = vunpack.c.h.b16 %v92
  %v286 = vunpack.c.l.b16 %v93
  %v287 = vunpack.c.h.b16 %v93
  %v288 = vunpack.c.l.b16 %v94
  %v289 = vunpack.c.h.b16 %v94
  %v290 = vunpack.c.l.b16 %v95
  %v291 = vunpack.c.h.b16 %v95
  %v292 = vunpack.c.l.b16 %v96
  %v293 = vunpack.c.h.b16 %v96
  %v294 = vunpack.c.l.b16 %v97
  %v295 = vunpack.c.h.b16 %v97
  %v296 = vunpack.c.l.b16 %v98
  %v297 = vunpack.c.h.b16 %v98
  %v298 = vunpack.c.l.b16 %v99
  %v299 = vunpack.c.h.b16 %v99
  %v300 = vunpack.c.l.b16 %v100
  %v301 = vunpack.c.h.b16 %v100
  %v302 = vunpack.c.l.b16 %v101
  %v303 = vunpack.c.h.b16 %v101
  %v304 = vpack.c.b16 %v180, %v176
  %v305 = vpack.c.b16 %v181, %v177
  %v306 = vpack.c.b16 %v182, %v178
  %v307 = vpack.c.b16 %v183, %v179
  %v308 = vpack.c.b16 %v188, %v184
  %v309 = vpack.c.b16 %v189, %v185
  %v310 = vpack.c.b16 %v190, %v186
  %v311 = vpack.c.b16 %v191, %v187
  %v312 = vpack.c.b16 %v196, %v192
  %v313 = vpack.c.b16 %v197, %v193
  %v314 = vpack.c.b16 %v198, %v194
  %v315 = vpack.c.b16 %v199, %v195
  %v316 = vpack.c.b16 %v204, %v200
  %v317 = vpack.c.b16 %v205, %v201
  %v318 = vpack.c.b16 %v206, %v202
  %v319 = vpack.c.b16 %v207, %v203
  %v320 = vpack.c.b16 %v212, %v208
  %v321 = vpack.c.b16 %v213, %v209
  %v322 = vpack.c.b16 %v214, %v210
  %v323 = vpack.c.b16 %v215, %v211
  %v324 = vpack.c.b16 %v220, %v216
  %v325 = vpack.c.b16 %v221, %v217
  %v326 = vpack.c.b16 %v222, %v218
  %v327 = vpack.c.b16 %v223, %v219
  %v328 = vpack.c.b16 %v228, %v224
  %v329 = vpack.c.b16 %v229, %v225
  %v330 = vpack.c.b16 %v230, %v226
  %v331 = vpack.c.b16 %v231, %v227
  %v332 = vpack.c.b16 %v236, %v232
  %v333 = vpack.c.b16 %v237, %v233
  %v334 = vpack.c.b16 %v238, %v234
  %v335 = vpack.c.b16 %v239, %v235
  %v336 = vpack.c.b16 %v244, %v240
  %v337 = vpack.c.b16 %v245, %v241
  %v338 = vpack.c.b16 %v246, %v242
  %v339 = vpack.c.b16 %v247, %v243
  %v340 = vpack.c.b16 %v252, %v248
  %v341 = vpack.c.b16 %v253, %v249
  %v342 = vpack.c.b16 %v254, %v250
  %v343 = vpack.c.b16 %v255, %v251
  %v344 = vpack.c.b16 %v260, %v256
  %v345 = vpack.c.b16 %v261, %v257
  %v346 = vpack.c.b16 %v262, %v258
  %v347 = vpack.c.b16 %v263, %v259
  %v348 = vpack.c.b16 %v268, %v264
  %v349 = vpack.c.b16 %v269, %v265
  %v350 = vpack.c.b16 %v270, %v266
  %v351 = vpack.c.b16 %v271, %v267
  %v352 = vpack.c.b16 %v276, %v272
  %v353 = vpack.c.b16 %v277, %v273
  %v354 = vpack.c.b16 %v278, %v274
  %v355 = vpack.c.b16 %v279, %v275
  %v356 = vpack.c.b16 %v284, %v280
  %v357 = vpack.c.b16 %v285, %v281
  %v358 = vpack.c.b16 %v286, %v282
  %v359 = vpack.c.b16 %v287, %v283
  %v360 = vpack.c.b16 %v292, %v288
  %v361 = vpack.c.b16 %v293, %v289
  %v362 = vpack.c.b16 %v294, %v290
  %v363 = vpack.c.b16 %v295, %v291
  %v364 = vpack.c.b16 %v300, %v296
  %v365 = vpack.c.b16 %v301, %v297
  %v366 = vpack.c.b16 %v302, %v298
  %v367 = vpack.c.b16 %v303, %v299
  %432 = vmatpush.bf16.msra.mxu0 %v332
  %433 = vmatpush.bf16.msra.mxu0 %v328
  %434 = vmatpush.bf16.msra.mxu0 %v324
  %435 = vmatpush.bf16.msra.mxu0 %v320
  %436 = vmatpush.bf16.msra.mxu0 %v316
  %437 = vmatpush.bf16.msra.mxu0 %v312
  %438 = vmatpush.bf16.msra.mxu0 %v308
  %439 = vmatpush.bf16.msra.mxu0 %v304
  %440 = vmatmul.bf16.gmra.mxu0 %v34
  %v441 = vpop.f32.mrf.mxu0
  %v442 = vadd.f32 %v104, %v441
  %v443 = vpop.f32.mrf.mxu0
  %v444 = vadd.f32 %v104, %v443
  %445 = vmatmul.bf16.gmra.mxu0 %v36
  %v446 = vpop.f32.mrf.mxu0
  %v447 = vadd.f32 %v104, %v446
  %v448 = vpop.f32.mrf.mxu0
  %v449 = vadd.f32 %v104, %v448
  %450 = vdwg.mxu0
  %451 = vmatpush.bf16.msra.mxu0 %v364
  %452 = vmatpush.bf16.msra.mxu0 %v360
  %453 = vmatpush.bf16.msra.mxu0 %v356
  %454 = vmatpush.bf16.msra.mxu0 %v352
  %455 = vmatpush.bf16.msra.mxu0 %v348
  %456 = vmatpush.bf16.msra.mxu0 %v344
  %457 = vmatpush.bf16.msra.mxu0 %v340
  %458 = vmatpush.bf16.msra.mxu0 %v336
  %459 = vmatmul.bf16.gmra.mxu0 %v35
  %v460 = vpop.f32.mrf.mxu0
  %v461 = vadd.f32 %v442, %v460
  %v462 = vpop.f32.mrf.mxu0
  %v463 = vadd.f32 %v444, %v462
  %464 = vmatmul.bf16.gmra.mxu0 %v37
  %v465 = vpop.f32.mrf.mxu0
  %v466 = vadd.f32 %v447, %v465
  %v467 = vpop.f32.mrf.mxu0
  %v468 = vadd.f32 %v449, %v467
  %469 = vdwg.mxu0
  %470 = vmatpush.bf16.msra.mxu0 %v333
  %471 = vmatpush.bf16.msra.mxu0 %v329
  %472 = vmatpush.bf16.msra.mxu0 %v325
  %473 = vmatpush.bf16.msra.mxu0 %v321
  %474 = vmatpush.bf16.msra.mxu0 %v317
  %475 = vmatpush.bf16.msra.mxu0 %v313
  %476 = vmatpush.bf16.msra.mxu0 %v309
  %477 = vmatpush.bf16.msra.mxu0 %v305
  %478 = vmatmul.bf16.gmra.mxu0 %v34
  %v479 = vpop.f32.mrf.mxu0
  %v480 = vadd.f32 %v105, %v479
  %v481 = vpop.f32.mrf.mxu0
  %v482 = vadd.f32 %v105, %v481
  %483 = vmatmul.bf16.gmra.mxu0 %v36
  %v484 = vpop.f32.mrf.mxu0
  %v485 = vadd.f32 %v105, %v484
  %v486 = vpop.f32.mrf.mxu0
  %v487 = vadd.f32 %v105, %v486
  %488 = vdwg.mxu0
  %489 = vmatpush.bf16.msra.mxu0 %v365
  %490 = vmatpush.bf16.msra.mxu0 %v361
  %491 = vmatpush.bf16.msra.mxu0 %v357
  %492 = vmatpush.bf16.msra.mxu0 %v353
  %493 = vmatpush.bf16.msra.mxu0 %v349
  %494 = vmatpush.bf16.msra.mxu0 %v345
  %495 = vmatpush.bf16.msra.mxu0 %v341
  %496 = vmatpush.bf16.msra.mxu0 %v337
  %497 = vmatmul.bf16.gmra.mxu0 %v35
  %v498 = vpop.f32.mrf.mxu0
  %v499 = vadd.f32 %v480, %v498
  %v500 = vpop.f32.mrf.mxu0
  %v501 = vadd.f32 %v482, %v500
  %502 = vmatmul.bf16.gmra.mxu0 %v37
  %v503 = vpop.f32.mrf.mxu0
  %v504 = vadd.f32 %v485, %v503
  %v505 = vpop.f32.mrf.mxu0
  %v506 = vadd.f32 %v487, %v505
  %507 = vdwg.mxu0
  %508 = vmatpush.bf16.msra.mxu0 %v334
  %509 = vmatpush.bf16.msra.mxu0 %v330
  %510 = vmatpush.bf16.msra.mxu0 %v326
  %511 = vmatpush.bf16.msra.mxu0 %v322
  %512 = vmatpush.bf16.msra.mxu0 %v318
  %513 = vmatpush.bf16.msra.mxu0 %v314
  %514 = vmatpush.bf16.msra.mxu0 %v310
  %515 = vmatpush.bf16.msra.mxu0 %v306
  %516 = vmatmul.bf16.gmra.mxu0 %v34
  %v517 = vpop.f32.mrf.mxu0
  %v518 = vadd.f32 %v106, %v517
  %v519 = vpop.f32.mrf.mxu0
  %v520 = vadd.f32 %v106, %v519
  %521 = vmatmul.bf16.gmra.mxu0 %v36
  %v522 = vpop.f32.mrf.mxu0
  %v523 = vadd.f32 %v106, %v522
  %v524 = vpop.f32.mrf.mxu0
  %v525 = vadd.f32 %v106, %v524
  %526 = vdwg.mxu0
  %527 = vmatpush.bf16.msra.mxu0 %v366
  %528 = vmatpush.bf16.msra.mxu0 %v362
  %529 = vmatpush.bf16.msra.mxu0 %v358
  %530 = vmatpush.bf16.msra.mxu0 %v354
  %531 = vmatpush.bf16.msra.mxu0 %v350
  %532 = vmatpush.bf16.msra.mxu0 %v346
  %533 = vmatpush.bf16.msra.mxu0 %v342
  %534 = vmatpush.bf16.msra.mxu0 %v338
  %535 = vmatmul.bf16.gmra.mxu0 %v35
  %v536 = vpop.f32.mrf.mxu0
  %v537 = vadd.f32 %v518, %v536
  %v538 = vpop.f32.mrf.mxu0
  %v539 = vadd.f32 %v520, %v538
  %540 = vmatmul.bf16.gmra.mxu0 %v37
  %v541 = vpop.f32.mrf.mxu0
  %v542 = vadd.f32 %v523, %v541
  %v543 = vpop.f32.mrf.mxu0
  %v544 = vadd.f32 %v525, %v543
  %545 = vdwg.mxu0
  %546 = vmatpush.bf16.msra.mxu0 %v335
  %547 = vmatpush.bf16.msra.mxu0 %v331
  %548 = vmatpush.bf16.msra.mxu0 %v327
  %549 = vmatpush.bf16.msra.mxu0 %v323
  %550 = vmatpush.bf16.msra.mxu0 %v319
  %551 = vmatpush.bf16.msra.mxu0 %v315
  %552 = vmatpush.bf16.msra.mxu0 %v311
  %553 = vmatpush.bf16.msra.mxu0 %v307
  %554 = vmatmul.bf16.gmra.mxu0 %v34
  %v555 = vpop.f32.mrf.mxu0
  %v556 = vadd.f32 %v107, %v555
  %v557 = vpop.f32.mrf.mxu0
  %v558 = vadd.f32 %v107, %v557
  %559 = vmatmul.bf16.gmra.mxu0 %v36
  %v560 = vpop.f32.mrf.mxu0
  %v561 = vadd.f32 %v107, %v560
  %v562 = vpop.f32.mrf.mxu0
  %v563 = vadd.f32 %v107, %v562
  %564 = vdwg.mxu0
  %565 = vmatpush.bf16.msra.mxu0 %v367
  %566 = vmatpush.bf16.msra.mxu0 %v363
  %567 = vmatpush.bf16.msra.mxu0 %v359
  %568 = vmatpush.bf16.msra.mxu0 %v355
  %569 = vmatpush.bf16.msra.mxu0 %v351
  %570 = vmatpush.bf16.msra.mxu0 %v347
  %571 = vmatpush.bf16.msra.mxu0 %v343
  %572 = vmatpush.bf16.msra.mxu0 %v339
  %573 = vmatmul.bf16.gmra.mxu0 %v35
  %v574 = vpop.f32.mrf.mxu0
  %v575 = vadd.f32 %v556, %v574
  %v576 = vpop.f32.mrf.mxu0
  %v577 = vadd.f32 %v558, %v576
  %578 = vmatmul.bf16.gmra.mxu0 %v37
  %v579 = vpop.f32.mrf.mxu0
  %v580 = vadd.f32 %v561, %v579
  %v581 = vpop.f32.mrf.mxu0
  %v582 = vadd.f32 %v563, %v581
  %583 = vdwg.mxu0
  %v584 = vxor.u32 %v461, 2147483648
  %v585 = vxor.u32 %v499, 2147483648
  %v586 = vxor.u32 %v537, 2147483648
  %v587 = vxor.u32 %v575, 2147483648
  %v588 = vxor.u32 %v463, 2147483648
  %v589 = vxor.u32 %v501, 2147483648
  %v590 = vxor.u32 %v539, 2147483648
  %v591 = vxor.u32 %v577, 2147483648
  %v592 = vxor.u32 %v466, 2147483648
  %v593 = vxor.u32 %v504, 2147483648
  %v594 = vxor.u32 %v542, 2147483648
  %v595 = vxor.u32 %v580, 2147483648
  %v596 = vxor.u32 %v468, 2147483648
  %v597 = vxor.u32 %v506, 2147483648
  %v598 = vxor.u32 %v544, 2147483648
  %v599 = vxor.u32 %v582, 2147483648
  %v600 = vmul.f32 %v584, 1.442695
  %v601 = vpow.pop %v600
  %v602 = vmul.f32 %v585, 1.442695
  %v603 = vpow.pop %v602
  %v604 = vmul.f32 %v586, 1.442695
  %v605 = vpow.pop %v604
  %v606 = vmul.f32 %v587, 1.442695
  %v607 = vpow.pop %v606
  %v608 = vmul.f32 %v588, 1.442695
  %v609 = vpow.pop %v608
  %v610 = vmul.f32 %v589, 1.442695
  %v611 = vpow.pop %v610
  %v612 = vmul.f32 %v590, 1.442695
  %v613 = vpow.pop %v612
  %v614 = vmul.f32 %v591, 1.442695
  %v615 = vpow.pop %v614
  %v616 = vmul.f32 %v592, 1.442695
  %v617 = vpow.pop %v616
  %v618 = vmul.f32 %v593, 1.442695
  %v619 = vpow.pop %v618
  %v620 = vmul.f32 %v594, 1.442695
  %v621 = vpow.pop %v620
  %v622 = vmul.f32 %v595, 1.442695
  %v623 = vpow.pop %v622
  %v624 = vmul.f32 %v596, 1.442695
  %v625 = vpow.pop %v624
  %v626 = vmul.f32 %v597, 1.442695
  %v627 = vpow.pop %v626
  %v628 = vmul.f32 %v598, 1.442695
  %v629 = vpow.pop %v628
  %v630 = vmul.f32 %v599, 1.442695
  %v631 = vpow.pop %v630
  %v632 = vadd.f32 %v601, 1.0
  %v633 = vadd.f32 %v603, 1.0
  %v634 = vadd.f32 %v605, 1.0
  %v635 = vadd.f32 %v607, 1.0
  %v636 = vadd.f32 %v609, 1.0
  %v637 = vadd.f32 %v611, 1.0
  %v638 = vadd.f32 %v613, 1.0
  %v639 = vadd.f32 %v615, 1.0
  %v640 = vadd.f32 %v617, 1.0
  %v641 = vadd.f32 %v619, 1.0
  %v642 = vadd.f32 %v621, 1.0
  %v643 = vadd.f32 %v623, 1.0
  %v644 = vadd.f32 %v625, 1.0
  %v645 = vadd.f32 %v627, 1.0
  %v646 = vadd.f32 %v629, 1.0
  %v647 = vadd.f32 %v631, 1.0
  %v648 = vrcp.pop %v632
  %v649 = vmul.f32 %v632, %v648
  %v650 = vsub.f32 1.0, %v649
  %v651 = vmul.f32 %v648, %v650
  %v652 = vadd.f32 %v648, %v651
  %vm653 = vweird.f32 %v632
  %vm654 = vweird.f32 %v648
  %vm655 = vmor %vm653, %vm654
  %v656 = vsel %vm655, %v648, %v652
  %v657 = vand.u32 2147483647, %v632
  %vm658 = vcmp.eq.f32.partialorder %v657, 8.507059e+37
  %v659 = vand.u32 %v632, 2147483648
  %v660 = vor.u32 1.1754944e-38, %v659
  %v661 = vsel %vm658, %v660, %v656
  %v662 = vmul.f32 1.0, %v661
  %v663 = vrcp.pop %v633
  %v664 = vmul.f32 %v633, %v663
  %v665 = vsub.f32 1.0, %v664
  %v666 = vmul.f32 %v663, %v665
  %v667 = vadd.f32 %v663, %v666
  %vm668 = vweird.f32 %v633
  %vm669 = vweird.f32 %v663
  %vm670 = vmor %vm668, %vm669
  %v671 = vsel %vm670, %v663, %v667
  %v672 = vand.u32 2147483647, %v633
  %vm673 = vcmp.eq.f32.partialorder %v672, 8.507059e+37
  %v674 = vand.u32 %v633, 2147483648
  %v675 = vor.u32 1.1754944e-38, %v674
  %v676 = vsel %vm673, %v675, %v671
  %v677 = vmul.f32 1.0, %v676
  %v678 = vrcp.pop %v634
  %v679 = vmul.f32 %v634, %v678
  %v680 = vsub.f32 1.0, %v679
  %v681 = vmul.f32 %v678, %v680
  %v682 = vadd.f32 %v678, %v681
  %vm683 = vweird.f32 %v634
  %vm684 = vweird.f32 %v678
  %vm685 = vmor %vm683, %vm684
  %v686 = vsel %vm685, %v678, %v682
  %v687 = vand.u32 2147483647, %v634
  %vm688 = vcmp.eq.f32.partialorder %v687, 8.507059e+37
  %v689 = vand.u32 %v634, 2147483648
  %v690 = vor.u32 1.1754944e-38, %v689
  %v691 = vsel %vm688, %v690, %v686
  %v692 = vmul.f32 1.0, %v691
  %v693 = vrcp.pop %v635
  %v694 = vmul.f32 %v635, %v693
  %v695 = vsub.f32 1.0, %v694
  %v696 = vmul.f32 %v693, %v695
  %v697 = vadd.f32 %v693, %v696
  %vm698 = vweird.f32 %v635
  %vm699 = vweird.f32 %v693
  %vm700 = vmor %vm698, %vm699
  %v701 = vsel %vm700, %v693, %v697
  %v702 = vand.u32 2147483647, %v635
  %vm703 = vcmp.eq.f32.partialorder %v702, 8.507059e+37
  %v704 = vand.u32 %v635, 2147483648
  %v705 = vor.u32 1.1754944e-38, %v704
  %v706 = vsel %vm703, %v705, %v701
  %v707 = vmul.f32 1.0, %v706
  %v708 = vrcp.pop %v636
  %v709 = vmul.f32 %v636, %v708
  %v710 = vsub.f32 1.0, %v709
  %v711 = vmul.f32 %v708, %v710
  %v712 = vadd.f32 %v708, %v711
  %vm713 = vweird.f32 %v636
  %vm714 = vweird.f32 %v708
  %vm715 = vmor %vm713, %vm714
  %v716 = vsel %vm715, %v708, %v712
  %v717 = vand.u32 2147483647, %v636
  %vm718 = vcmp.eq.f32.partialorder %v717, 8.507059e+37
  %v719 = vand.u32 %v636, 2147483648
  %v720 = vor.u32 1.1754944e-38, %v719
  %v721 = vsel %vm718, %v720, %v716
  %v722 = vmul.f32 1.0, %v721
  %v723 = vrcp.pop %v637
  %v724 = vmul.f32 %v637, %v723
  %v725 = vsub.f32 1.0, %v724
  %v726 = vmul.f32 %v723, %v725
  %v727 = vadd.f32 %v723, %v726
  %vm728 = vweird.f32 %v637
  %vm729 = vweird.f32 %v723
  %vm730 = vmor %vm728, %vm729
  %v731 = vsel %vm730, %v723, %v727
  %v732 = vand.u32 2147483647, %v637
  %vm733 = vcmp.eq.f32.partialorder %v732, 8.507059e+37
  %v734 = vand.u32 %v637, 2147483648
  %v735 = vor.u32 1.1754944e-38, %v734
  %v736 = vsel %vm733, %v735, %v731
  %v737 = vmul.f32 1.0, %v736
  %v738 = vrcp.pop %v638
  %v739 = vmul.f32 %v638, %v738
  %v740 = vsub.f32 1.0, %v739
  %v741 = vmul.f32 %v738, %v740
  %v742 = vadd.f32 %v738, %v741
  %vm743 = vweird.f32 %v638
  %vm744 = vweird.f32 %v738
  %vm745 = vmor %vm743, %vm744
  %v746 = vsel %vm745, %v738, %v742
  %v747 = vand.u32 2147483647, %v638
  %vm748 = vcmp.eq.f32.partialorder %v747, 8.507059e+37
  %v749 = vand.u32 %v638, 2147483648
  %v750 = vor.u32 1.1754944e-38, %v749
  %v751 = vsel %vm748, %v750, %v746
  %v752 = vmul.f32 1.0, %v751
  %v753 = vrcp.pop %v639
  %v754 = vmul.f32 %v639, %v753
  %v755 = vsub.f32 1.0, %v754
  %v756 = vmul.f32 %v753, %v755
  %v757 = vadd.f32 %v753, %v756
  %vm758 = vweird.f32 %v639
  %vm759 = vweird.f32 %v753
  %vm760 = vmor %vm758, %vm759
  %v761 = vsel %vm760, %v753, %v757
  %v762 = vand.u32 2147483647, %v639
  %vm763 = vcmp.eq.f32.partialorder %v762, 8.507059e+37
  %v764 = vand.u32 %v639, 2147483648
  %v765 = vor.u32 1.1754944e-38, %v764
  %v766 = vsel %vm763, %v765, %v761
  %v767 = vmul.f32 1.0, %v766
  %v768 = vrcp.pop %v640
  %v769 = vmul.f32 %v640, %v768
  %v770 = vsub.f32 1.0, %v769
  %v771 = vmul.f32 %v768, %v770
  %v772 = vadd.f32 %v768, %v771
  %vm773 = vweird.f32 %v640
  %vm774 = vweird.f32 %v768
  %vm775 = vmor %vm773, %vm774
  %v776 = vsel %vm775, %v768, %v772
  %v777 = vand.u32 2147483647, %v640
  %vm778 = vcmp.eq.f32.partialorder %v777, 8.507059e+37
  %v779 = vand.u32 %v640, 2147483648
  %v780 = vor.u32 1.1754944e-38, %v779
  %v781 = vsel %vm778, %v780, %v776
  %v782 = vmul.f32 1.0, %v781
  %v783 = vrcp.pop %v641
  %v784 = vmul.f32 %v641, %v783
  %v785 = vsub.f32 1.0, %v784
  %v786 = vmul.f32 %v783, %v785
  %v787 = vadd.f32 %v783, %v786
  %vm788 = vweird.f32 %v641
  %vm789 = vweird.f32 %v783
  %vm790 = vmor %vm788, %vm789
  %v791 = vsel %vm790, %v783, %v787
  %v792 = vand.u32 2147483647, %v641
  %vm793 = vcmp.eq.f32.partialorder %v792, 8.507059e+37
  %v794 = vand.u32 %v641, 2147483648
  %v795 = vor.u32 1.1754944e-38, %v794
  %v796 = vsel %vm793, %v795, %v791
  %v797 = vmul.f32 1.0, %v796
  %v798 = vrcp.pop %v642
  %v799 = vmul.f32 %v642, %v798
  %v800 = vsub.f32 1.0, %v799
  %v801 = vmul.f32 %v798, %v800
  %v802 = vadd.f32 %v798, %v801
  %vm803 = vweird.f32 %v642
  %vm804 = vweird.f32 %v798
  %vm805 = vmor %vm803, %vm804
  %v806 = vsel %vm805, %v798, %v802
  %v807 = vand.u32 2147483647, %v642
  %vm808 = vcmp.eq.f32.partialorder %v807, 8.507059e+37
  %v809 = vand.u32 %v642, 2147483648
  %v810 = vor.u32 1.1754944e-38, %v809
  %v811 = vsel %vm808, %v810, %v806
  %v812 = vmul.f32 1.0, %v811
  %v813 = vrcp.pop %v643
  %v814 = vmul.f32 %v643, %v813
  %v815 = vsub.f32 1.0, %v814
  %v816 = vmul.f32 %v813, %v815
  %v817 = vadd.f32 %v813, %v816
  %vm818 = vweird.f32 %v643
  %vm819 = vweird.f32 %v813
  %vm820 = vmor %vm818, %vm819
  %v821 = vsel %vm820, %v813, %v817
  %v822 = vand.u32 2147483647, %v643
  %vm823 = vcmp.eq.f32.partialorder %v822, 8.507059e+37
  %v824 = vand.u32 %v643, 2147483648
  %v825 = vor.u32 1.1754944e-38, %v824
  %v826 = vsel %vm823, %v825, %v821
  %v827 = vmul.f32 1.0, %v826
  %v828 = vrcp.pop %v644
  %v829 = vmul.f32 %v644, %v828
  %v830 = vsub.f32 1.0, %v829
  %v831 = vmul.f32 %v828, %v830
  %v832 = vadd.f32 %v828, %v831
  %vm833 = vweird.f32 %v644
  %vm834 = vweird.f32 %v828
  %vm835 = vmor %vm833, %vm834
  %v836 = vsel %vm835, %v828, %v832
  %v837 = vand.u32 2147483647, %v644
  %vm838 = vcmp.eq.f32.partialorder %v837, 8.507059e+37
  %v839 = vand.u32 %v644, 2147483648
  %v840 = vor.u32 1.1754944e-38, %v839
  %v841 = vsel %vm838, %v840, %v836
  %v842 = vmul.f32 1.0, %v841
  %v843 = vrcp.pop %v645
  %v844 = vmul.f32 %v645, %v843
  %v845 = vsub.f32 1.0, %v844
  %v846 = vmul.f32 %v843, %v845
  %v847 = vadd.f32 %v843, %v846
  %vm848 = vweird.f32 %v645
  %vm849 = vweird.f32 %v843
  %vm850 = vmor %vm848, %vm849
  %v851 = vsel %vm850, %v843, %v847
  %v852 = vand.u32 2147483647, %v645
  %vm853 = vcmp.eq.f32.partialorder %v852, 8.507059e+37
  %v854 = vand.u32 %v645, 2147483648
  %v855 = vor.u32 1.1754944e-38, %v854
  %v856 = vsel %vm853, %v855, %v851
  %v857 = vmul.f32 1.0, %v856
  %v858 = vrcp.pop %v646
  %v859 = vmul.f32 %v646, %v858
  %v860 = vsub.f32 1.0, %v859
  %v861 = vmul.f32 %v858, %v860
  %v862 = vadd.f32 %v858, %v861
  %vm863 = vweird.f32 %v646
  %vm864 = vweird.f32 %v858
  %vm865 = vmor %vm863, %vm864
  %v866 = vsel %vm865, %v858, %v862
  %v867 = vand.u32 2147483647, %v646
  %vm868 = vcmp.eq.f32.partialorder %v867, 8.507059e+37
  %v869 = vand.u32 %v646, 2147483648
  %v870 = vor.u32 1.1754944e-38, %v869
  %v871 = vsel %vm868, %v870, %v866
  %v872 = vmul.f32 1.0, %v871
  %v873 = vrcp.pop %v647
  %v874 = vmul.f32 %v647, %v873
  %v875 = vsub.f32 1.0, %v874
  %v876 = vmul.f32 %v873, %v875
  %v877 = vadd.f32 %v873, %v876
  %vm878 = vweird.f32 %v647
  %vm879 = vweird.f32 %v873
  %vm880 = vmor %vm878, %vm879
  %v881 = vsel %vm880, %v873, %v877
  %v882 = vand.u32 2147483647, %v647
  %vm883 = vcmp.eq.f32.partialorder %v882, 8.507059e+37
  %v884 = vand.u32 %v647, 2147483648
  %v885 = vor.u32 1.1754944e-38, %v884
  %v886 = vsel %vm883, %v885, %v881
  %v887 = vmul.f32 1.0, %v886
  %v888 = vpack.c.bf16 %v722, %v662
  %v889 = vpack.c.bf16 %v737, %v677
  %v890 = vpack.c.bf16 %v752, %v692
  %v891 = vpack.c.bf16 %v767, %v707
  %v892 = vpack.c.bf16 %v842, %v782
  %v893 = vpack.c.bf16 %v857, %v797
  %v894 = vpack.c.bf16 %v872, %v812
  %v895 = vpack.c.bf16 %v887, %v827
  %v896 = vld [vmem:[%s3] sm:$0xff]
  %v897 = vld [vmem:[%s3 + $0x8] sm:$0xff]
  %v898 = vld [vmem:[%s3 + $0x10] sm:$0xff]
  %v899 = vld [vmem:[%s3 + $0x18] sm:$0xff]
  %v900 = vld [vmem:[%s3 + $0x20] sm:$0xff]
  %v901 = vld [vmem:[%s3 + $0x28] sm:$0xff]
  %v902 = vld [vmem:[%s3 + $0x30] sm:$0xff]
  %v903 = vld [vmem:[%s3 + $0x38] sm:$0xff]
  %v904 = vld [vmem:[%s3 + $0x40] sm:$0xff]
  %v905 = vld [vmem:[%s3 + $0x48] sm:$0xff]
  %v906 = vld [vmem:[%s3 + $0x50] sm:$0xff]
  %v907 = vld [vmem:[%s3 + $0x58] sm:$0xff]
  %v908 = vld [vmem:[%s3 + $0x60] sm:$0xff]
  %v909 = vld [vmem:[%s3 + $0x68] sm:$0xff]
  %v910 = vld [vmem:[%s3 + $0x70] sm:$0xff]
  %v911 = vld [vmem:[%s3 + $0x78] sm:$0xff]
  %v912 = vld [vmem:[%s3 + $0x80] sm:$0xff]
  %v913 = vld [vmem:[%s3 + $0x88] sm:$0xff]
  %v914 = vld [vmem:[%s3 + $0x90] sm:$0xff]
  %v915 = vld [vmem:[%s3 + $0x98] sm:$0xff]
  %v916 = vld [vmem:[%s3 + $0xa0] sm:$0xff]
  %v917 = vld [vmem:[%s3 + $0xa8] sm:$0xff]
  %v918 = vld [vmem:[%s3 + $0xb0] sm:$0xff]
  %v919 = vld [vmem:[%s3 + $0xb8] sm:$0xff]
  %v920 = vld [vmem:[%s3 + $0xc0] sm:$0xff]
  %v921 = vld [vmem:[%s3 + $0xc8] sm:$0xff]
  %v922 = vld [vmem:[%s3 + $0xd0] sm:$0xff]
  %v923 = vld [vmem:[%s3 + $0xd8] sm:$0xff]
  %v924 = vld [vmem:[%s3 + $0xe0] sm:$0xff]
  %v925 = vld [vmem:[%s3 + $0xe8] sm:$0xff]
  %v926 = vld [vmem:[%s3 + $0xf0] sm:$0xff]
  %v927 = vld [vmem:[%s3 + $0xf8] sm:$0xff]
  %v928 = vld [vmem:[%s3 + $0x100] sm:$0xff]
  %v929 = vld [vmem:[%s3 + $0x108] sm:$0xff]
  %v930 = vld [vmem:[%s3 + $0x110] sm:$0xff]
  %v931 = vld [vmem:[%s3 + $0x118] sm:$0xff]
  %v932 = vld [vmem:[%s3 + $0x120] sm:$0xff]
  %v933 = vld [vmem:[%s3 + $0x128] sm:$0xff]
  %v934 = vld [vmem:[%s3 + $0x130] sm:$0xff]
  %v935 = vld [vmem:[%s3 + $0x138] sm:$0xff]
  %v936 = vld [vmem:[%s3 + $0x140] sm:$0xff]
  %v937 = vld [vmem:[%s3 + $0x148] sm:$0xff]
  %v938 = vld [vmem:[%s3 + $0x150] sm:$0xff]
  %v939 = vld [vmem:[%s3 + $0x158] sm:$0xff]
  %v940 = vld [vmem:[%s3 + $0x160] sm:$0xff]
  %v941 = vld [vmem:[%s3 + $0x168] sm:$0xff]
  %v942 = vld [vmem:[%s3 + $0x170] sm:$0xff]
  %v943 = vld [vmem:[%s3 + $0x178] sm:$0xff]
  %v944 = vld [vmem:[%s3 + $0x180] sm:$0xff]
  %v945 = vld [vmem:[%s3 + $0x188] sm:$0xff]
  %v946 = vld [vmem:[%s3 + $0x190] sm:$0xff]
  %v947 = vld [vmem:[%s3 + $0x198] sm:$0xff]
  %v948 = vld [vmem:[%s3 + $0x1a0] sm:$0xff]
  %v949 = vld [vmem:[%s3 + $0x1a8] sm:$0xff]
  %v950 = vld [vmem:[%s3 + $0x1b0] sm:$0xff]
  %v951 = vld [vmem:[%s3 + $0x1b8] sm:$0xff]
  %v952 = vld [vmem:[%s3 + $0x1c0] sm:$0xff]
  %v953 = vld [vmem:[%s3 + $0x1c8] sm:$0xff]
  %v954 = vld [vmem:[%s3 + $0x1d0] sm:$0xff]
  %v955 = vld [vmem:[%s3 + $0x1d8] sm:$0xff]
  %v956 = vld [vmem:[%s3 + $0x1e0] sm:$0xff]
  %v957 = vld [vmem:[%s3 + $0x1e8] sm:$0xff]
  %v958 = vld [vmem:[%s3 + $0x1f0] sm:$0xff]
  %v959 = vld [vmem:[%s3 + $0x1f8] sm:$0xff]
  %v960 = vld [vmem:[%s4] sm:$0x3]
  %v962 = vperm.slane %v960, 0
  %v963 = vperm.slane %v960, 1
  %v1030 = vunpack.c.l.b16 %v896
  %v1031 = vunpack.c.h.b16 %v896
  %v1032 = vunpack.c.l.b16 %v897
  %v1033 = vunpack.c.h.b16 %v897
  %v1034 = vunpack.c.l.b16 %v898
  %v1035 = vunpack.c.h.b16 %v898
  %v1036 = vunpack.c.l.b16 %v899
  %v1037 = vunpack.c.h.b16 %v899
  %v1038 = vunpack.c.l.b16 %v900
  %v1039 = vunpack.c.h.b16 %v900
  %v1040 = vunpack.c.l.b16 %v901
  %v1041 = vunpack.c.h.b16 %v901
  %v1042 = vunpack.c.l.b16 %v902
  %v1043 = vunpack.c.h.b16 %v902
  %v1044 = vunpack.c.l.b16 %v903
  %v1045 = vunpack.c.h.b16 %v903
  %v1046 = vunpack.c.l.b16 %v904
  %v1047 = vunpack.c.h.b16 %v904
  %v1048 = vunpack.c.l.b16 %v905
  %v1049 = vunpack.c.h.b16 %v905
  %v1050 = vunpack.c.l.b16 %v906
  %v1051 = vunpack.c.h.b16 %v906
  %v1052 = vunpack.c.l.b16 %v907
  %v1053 = vunpack.c.h.b16 %v907
  %v1054 = vunpack.c.l.b16 %v908
  %v1055 = vunpack.c.h.b16 %v908
  %v1056 = vunpack.c.l.b16 %v909
  %v1057 = vunpack.c.h.b16 %v909
  %v1058 = vunpack.c.l.b16 %v910
  %v1059 = vunpack.c.h.b16 %v910
  %v1060 = vunpack.c.l.b16 %v911
  %v1061 = vunpack.c.h.b16 %v911
  %v1062 = vunpack.c.l.b16 %v912
  %v1063 = vunpack.c.h.b16 %v912
  %v1064 = vunpack.c.l.b16 %v913
  %v1065 = vunpack.c.h.b16 %v913
  %v1066 = vunpack.c.l.b16 %v914
  %v1067 = vunpack.c.h.b16 %v914
  %v1068 = vunpack.c.l.b16 %v915
  %v1069 = vunpack.c.h.b16 %v915
  %v1070 = vunpack.c.l.b16 %v916
  %v1071 = vunpack.c.h.b16 %v916
  %v1072 = vunpack.c.l.b16 %v917
  %v1073 = vunpack.c.h.b16 %v917
  %v1074 = vunpack.c.l.b16 %v918
  %v1075 = vunpack.c.h.b16 %v918
  %v1076 = vunpack.c.l.b16 %v919
  %v1077 = vunpack.c.h.b16 %v919
  %v1078 = vunpack.c.l.b16 %v920
  %v1079 = vunpack.c.h.b16 %v920
  %v1080 = vunpack.c.l.b16 %v921
  %v1081 = vunpack.c.h.b16 %v921
  %v1082 = vunpack.c.l.b16 %v922
  %v1083 = vunpack.c.h.b16 %v922
  %v1084 = vunpack.c.l.b16 %v923
  %v1085 = vunpack.c.h.b16 %v923
  %v1086 = vunpack.c.l.b16 %v924
  %v1087 = vunpack.c.h.b16 %v924
  %v1088 = vunpack.c.l.b16 %v925
  %v1089 = vunpack.c.h.b16 %v925
  %v1090 = vunpack.c.l.b16 %v926
  %v1091 = vunpack.c.h.b16 %v926
  %v1092 = vunpack.c.l.b16 %v927
  %v1093 = vunpack.c.h.b16 %v927
  %v1094 = vunpack.c.l.b16 %v928
  %v1095 = vunpack.c.h.b16 %v928
  %v1096 = vunpack.c.l.b16 %v929
  %v1097 = vunpack.c.h.b16 %v929
  %v1098 = vunpack.c.l.b16 %v930
  %v1099 = vunpack.c.h.b16 %v930
  %v1100 = vunpack.c.l.b16 %v931
  %v1101 = vunpack.c.h.b16 %v931
  %v1102 = vunpack.c.l.b16 %v932
  %v1103 = vunpack.c.h.b16 %v932
  %v1104 = vunpack.c.l.b16 %v933
  %v1105 = vunpack.c.h.b16 %v933
  %v1106 = vunpack.c.l.b16 %v934
  %v1107 = vunpack.c.h.b16 %v934
  %v1108 = vunpack.c.l.b16 %v935
  %v1109 = vunpack.c.h.b16 %v935
  %v1110 = vunpack.c.l.b16 %v936
  %v1111 = vunpack.c.h.b16 %v936
  %v1112 = vunpack.c.l.b16 %v937
  %v1113 = vunpack.c.h.b16 %v937
  %v1114 = vunpack.c.l.b16 %v938
  %v1115 = vunpack.c.h.b16 %v938
  %v1116 = vunpack.c.l.b16 %v939
  %v1117 = vunpack.c.h.b16 %v939
  %v1118 = vunpack.c.l.b16 %v940
  %v1119 = vunpack.c.h.b16 %v940
  %v1120 = vunpack.c.l.b16 %v941
  %v1121 = vunpack.c.h.b16 %v941
  %v1122 = vunpack.c.l.b16 %v942
  %v1123 = vunpack.c.h.b16 %v942
  %v1124 = vunpack.c.l.b16 %v943
  %v1125 = vunpack.c.h.b16 %v943
  %v1126 = vunpack.c.l.b16 %v944
  %v1127 = vunpack.c.h.b16 %v944
  %v1128 = vunpack.c.l.b16 %v945
  %v1129 = vunpack.c.h.b16 %v945
  %v1130 = vunpack.c.l.b16 %v946
  %v1131 = vunpack.c.h.b16 %v946
  %v1132 = vunpack.c.l.b16 %v947
  %v1133 = vunpack.c.h.b16 %v947
  %v1134 = vunpack.c.l.b16 %v948
  %v1135 = vunpack.c.h.b16 %v948
  %v1136 = vunpack.c.l.b16 %v949
  %v1137 = vunpack.c.h.b16 %v949
  %v1138 = vunpack.c.l.b16 %v950
  %v1139 = vunpack.c.h.b16 %v950
  %v1140 = vunpack.c.l.b16 %v951
  %v1141 = vunpack.c.h.b16 %v951
  %v1142 = vunpack.c.l.b16 %v952
  %v1143 = vunpack.c.h.b16 %v952
  %v1144 = vunpack.c.l.b16 %v953
  %v1145 = vunpack.c.h.b16 %v953
  %v1146 = vunpack.c.l.b16 %v954
  %v1147 = vunpack.c.h.b16 %v954
  %v1148 = vunpack.c.l.b16 %v955
  %v1149 = vunpack.c.h.b16 %v955
  %v1150 = vunpack.c.l.b16 %v956
  %v1151 = vunpack.c.h.b16 %v956
  %v1152 = vunpack.c.l.b16 %v957
  %v1153 = vunpack.c.h.b16 %v957
  %v1154 = vunpack.c.l.b16 %v958
  %v1155 = vunpack.c.h.b16 %v958
  %v1156 = vunpack.c.l.b16 %v959
  %v1157 = vunpack.c.h.b16 %v959
  %v1158 = vpack.c.b16 %v1032, %v1030
  %v1159 = vpack.c.b16 %v1033, %v1031
  %v1160 = vpack.c.b16 %v1036, %v1034
  %v1161 = vpack.c.b16 %v1037, %v1035
  %v1162 = vpack.c.b16 %v1040, %v1038
  %v1163 = vpack.c.b16 %v1041, %v1039
  %v1164 = vpack.c.b16 %v1044, %v1042
  %v1165 = vpack.c.b16 %v1045, %v1043
  %v1166 = vpack.c.b16 %v1048, %v1046
  %v1167 = vpack.c.b16 %v1049, %v1047
  %v1168 = vpack.c.b16 %v1052, %v1050
  %v1169 = vpack.c.b16 %v1053, %v1051
  %v1170 = vpack.c.b16 %v1056, %v1054
  %v1171 = vpack.c.b16 %v1057, %v1055
  %v1172 = vpack.c.b16 %v1060, %v1058
  %v1173 = vpack.c.b16 %v1061, %v1059
  %v1174 = vpack.c.b16 %v1064, %v1062
  %v1175 = vpack.c.b16 %v1065, %v1063
  %v1176 = vpack.c.b16 %v1068, %v1066
  %v1177 = vpack.c.b16 %v1069, %v1067
  %v1178 = vpack.c.b16 %v1072, %v1070
  %v1179 = vpack.c.b16 %v1073, %v1071
  %v1180 = vpack.c.b16 %v1076, %v1074
  %v1181 = vpack.c.b16 %v1077, %v1075
  %v1182 = vpack.c.b16 %v1080, %v1078
  %v1183 = vpack.c.b16 %v1081, %v1079
  %v1184 = vpack.c.b16 %v1084, %v1082
  %v1185 = vpack.c.b16 %v1085, %v1083
  %v1186 = vpack.c.b16 %v1088, %v1086
  %v1187 = vpack.c.b16 %v1089, %v1087
  %v1188 = vpack.c.b16 %v1092, %v1090
  %v1189 = vpack.c.b16 %v1093, %v1091
  %v1190 = vpack.c.b16 %v1096, %v1094
  %v1191 = vpack.c.b16 %v1097, %v1095
  %v1192 = vpack.c.b16 %v1100, %v1098
  %v1193 = vpack.c.b16 %v1101, %v1099
  %v1194 = vpack.c.b16 %v1104, %v1102
  %v1195 = vpack.c.b16 %v1105, %v1103
  %v1196 = vpack.c.b16 %v1108, %v1106
  %v1197 = vpack.c.b16 %v1109, %v1107
  %v1198 = vpack.c.b16 %v1112, %v1110
  %v1199 = vpack.c.b16 %v1113, %v1111
  %v1200 = vpack.c.b16 %v1116, %v1114
  %v1201 = vpack.c.b16 %v1117, %v1115
  %v1202 = vpack.c.b16 %v1120, %v1118
  %v1203 = vpack.c.b16 %v1121, %v1119
  %v1204 = vpack.c.b16 %v1124, %v1122
  %v1205 = vpack.c.b16 %v1125, %v1123
  %v1206 = vpack.c.b16 %v1128, %v1126
  %v1207 = vpack.c.b16 %v1129, %v1127
  %v1208 = vpack.c.b16 %v1132, %v1130
  %v1209 = vpack.c.b16 %v1133, %v1131
  %v1210 = vpack.c.b16 %v1136, %v1134
  %v1211 = vpack.c.b16 %v1137, %v1135
  %v1212 = vpack.c.b16 %v1140, %v1138
  %v1213 = vpack.c.b16 %v1141, %v1139
  %v1214 = vpack.c.b16 %v1144, %v1142
  %v1215 = vpack.c.b16 %v1145, %v1143
  %v1216 = vpack.c.b16 %v1148, %v1146
  %v1217 = vpack.c.b16 %v1149, %v1147
  %v1218 = vpack.c.b16 %v1152, %v1150
  %v1219 = vpack.c.b16 %v1153, %v1151
  %v1220 = vpack.c.b16 %v1156, %v1154
  %v1221 = vpack.c.b16 %v1157, %v1155
  %1286 = vmatpush.bf16.msra.mxu0 %v1172
  %1287 = vmatpush.bf16.msra.mxu0 %v1170
  %1288 = vmatpush.bf16.msra.mxu0 %v1168
  %1289 = vmatpush.bf16.msra.mxu0 %v1166
  %1290 = vmatpush.bf16.msra.mxu0 %v1164
  %1291 = vmatpush.bf16.msra.mxu0 %v1162
  %1292 = vmatpush.bf16.msra.mxu0 %v1160
  %1293 = vmatpush.bf16.msra.mxu0 %v1158
  %1294 = vmatmul.bf16.gmra.mxu0 %v888
  %v1295 = vpop.f32.mrf.mxu0
  %v1296 = vadd.f32 %v962, %v1295
  %v1297 = vpop.f32.mrf.mxu0
  %v1298 = vadd.f32 %v962, %v1297
  %1299 = vmatmul.bf16.gmra.mxu0 %v892
  %v1300 = vpop.f32.mrf.mxu0
  %v1301 = vadd.f32 %v962, %v1300
  %v1302 = vpop.f32.mrf.mxu0
  %v1303 = vadd.f32 %v962, %v1302
  %1304 = vdwg.mxu0
  %1305 = vmatpush.bf16.msra.mxu0 %v1188
  %1306 = vmatpush.bf16.msra.mxu0 %v1186
  %1307 = vmatpush.bf16.msra.mxu0 %v1184
  %1308 = vmatpush.bf16.msra.mxu0 %v1182
  %1309 = vmatpush.bf16.msra.mxu0 %v1180
  %1310 = vmatpush.bf16.msra.mxu0 %v1178
  %1311 = vmatpush.bf16.msra.mxu0 %v1176
  %1312 = vmatpush.bf16.msra.mxu0 %v1174
  %1313 = vmatmul.bf16.gmra.mxu0 %v889
  %v1314 = vpop.f32.mrf.mxu0
  %v1315 = vadd.f32 %v1296, %v1314
  %v1316 = vpop.f32.mrf.mxu0
  %v1317 = vadd.f32 %v1298, %v1316
  %1318 = vmatmul.bf16.gmra.mxu0 %v893
  %v1319 = vpop.f32.mrf.mxu0
  %v1320 = vadd.f32 %v1301, %v1319
  %v1321 = vpop.f32.mrf.mxu0
  %v1322 = vadd.f32 %v1303, %v1321
  %1323 = vdwg.mxu0
  %1324 = vmatpush.bf16.msra.mxu0 %v1204
  %1325 = vmatpush.bf16.msra.mxu0 %v1202
  %1326 = vmatpush.bf16.msra.mxu0 %v1200
  %1327 = vmatpush.bf16.msra.mxu0 %v1198
  %1328 = vmatpush.bf16.msra.mxu0 %v1196
  %1329 = vmatpush.bf16.msra.mxu0 %v1194
  %1330 = vmatpush.bf16.msra.mxu0 %v1192
  %1331 = vmatpush.bf16.msra.mxu0 %v1190
  %1332 = vmatmul.bf16.gmra.mxu0 %v890
  %v1333 = vpop.f32.mrf.mxu0
  %v1334 = vadd.f32 %v1315, %v1333
  %v1335 = vpop.f32.mrf.mxu0
  %v1336 = vadd.f32 %v1317, %v1335
  %1337 = vmatmul.bf16.gmra.mxu0 %v894
  %v1338 = vpop.f32.mrf.mxu0
  %v1339 = vadd.f32 %v1320, %v1338
  %v1340 = vpop.f32.mrf.mxu0
  %v1341 = vadd.f32 %v1322, %v1340
  %1342 = vdwg.mxu0
  %1343 = vmatpush.bf16.msra.mxu0 %v1220
  %1344 = vmatpush.bf16.msra.mxu0 %v1218
  %1345 = vmatpush.bf16.msra.mxu0 %v1216
  %1346 = vmatpush.bf16.msra.mxu0 %v1214
  %1347 = vmatpush.bf16.msra.mxu0 %v1212
  %1348 = vmatpush.bf16.msra.mxu0 %v1210
  %1349 = vmatpush.bf16.msra.mxu0 %v1208
  %1350 = vmatpush.bf16.msra.mxu0 %v1206
  %1351 = vmatmul.bf16.gmra.mxu0 %v891
  %v1352 = vpop.f32.mrf.mxu0
  %v1353 = vadd.f32 %v1334, %v1352
  %v1354 = vpop.f32.mrf.mxu0
  %v1355 = vadd.f32 %v1336, %v1354
  %1356 = vmatmul.bf16.gmra.mxu0 %v895
  %v1357 = vpop.f32.mrf.mxu0
  %v1358 = vadd.f32 %v1339, %v1357
  %v1359 = vpop.f32.mrf.mxu0
  %v1360 = vadd.f32 %v1341, %v1359
  %1361 = vdwg.mxu0
  %1362 = vmatpush.bf16.msra.mxu0 %v1173
  %1363 = vmatpush.bf16.msra.mxu0 %v1171
  %1364 = vmatpush.bf16.msra.mxu0 %v1169
  %1365 = vmatpush.bf16.msra.mxu0 %v1167
  %1366 = vmatpush.bf16.msra.mxu0 %v1165
  %1367 = vmatpush.bf16.msra.mxu0 %v1163
  %1368 = vmatpush.bf16.msra.mxu0 %v1161
  %1369 = vmatpush.bf16.msra.mxu0 %v1159
  %1370 = vmatmul.bf16.gmra.mxu0 %v888
  %v1371 = vpop.f32.mrf.mxu0
  %v1372 = vadd.f32 %v963, %v1371
  %v1373 = vpop.f32.mrf.mxu0
  %v1374 = vadd.f32 %v963, %v1373
  %1375 = vmatmul.bf16.gmra.mxu0 %v892
  %v1376 = vpop.f32.mrf.mxu0
  %v1377 = vadd.f32 %v963, %v1376
  %v1378 = vpop.f32.mrf.mxu0
  %v1379 = vadd.f32 %v963, %v1378
  %1380 = vdwg.mxu0
  %1381 = vmatpush.bf16.msra.mxu0 %v1189
  %1382 = vmatpush.bf16.msra.mxu0 %v1187
  %1383 = vmatpush.bf16.msra.mxu0 %v1185
  %1384 = vmatpush.bf16.msra.mxu0 %v1183
  %1385 = vmatpush.bf16.msra.mxu0 %v1181
  %1386 = vmatpush.bf16.msra.mxu0 %v1179
  %1387 = vmatpush.bf16.msra.mxu0 %v1177
  %1388 = vmatpush.bf16.msra.mxu0 %v1175
  %1389 = vmatmul.bf16.gmra.mxu0 %v889
  %v1390 = vpop.f32.mrf.mxu0
  %v1391 = vadd.f32 %v1372, %v1390
  %v1392 = vpop.f32.mrf.mxu0
  %v1393 = vadd.f32 %v1374, %v1392
  %1394 = vmatmul.bf16.gmra.mxu0 %v893
  %v1395 = vpop.f32.mrf.mxu0
  %v1396 = vadd.f32 %v1377, %v1395
  %v1397 = vpop.f32.mrf.mxu0
  %v1398 = vadd.f32 %v1379, %v1397
  %1399 = vdwg.mxu0
  %1400 = vmatpush.bf16.msra.mxu0 %v1205
  %1401 = vmatpush.bf16.msra.mxu0 %v1203
  %1402 = vmatpush.bf16.msra.mxu0 %v1201
  %1403 = vmatpush.bf16.msra.mxu0 %v1199
  %1404 = vmatpush.bf16.msra.mxu0 %v1197
  %1405 = vmatpush.bf16.msra.mxu0 %v1195
  %1406 = vmatpush.bf16.msra.mxu0 %v1193
  %1407 = vmatpush.bf16.msra.mxu0 %v1191
  %1408 = vmatmul.bf16.gmra.mxu0 %v890
  %v1409 = vpop.f32.mrf.mxu0
  %v1410 = vadd.f32 %v1391, %v1409
  %v1411 = vpop.f32.mrf.mxu0
  %v1412 = vadd.f32 %v1393, %v1411
  %1413 = vmatmul.bf16.gmra.mxu0 %v894
  %v1414 = vpop.f32.mrf.mxu0
  %v1415 = vadd.f32 %v1396, %v1414
  %v1416 = vpop.f32.mrf.mxu0
  %v1417 = vadd.f32 %v1398, %v1416
  %1418 = vdwg.mxu0
  %1419 = vmatpush.bf16.msra.mxu0 %v1221
  %1420 = vmatpush.bf16.msra.mxu0 %v1219
  %1421 = vmatpush.bf16.msra.mxu0 %v1217
  %1422 = vmatpush.bf16.msra.mxu0 %v1215
  %1423 = vmatpush.bf16.msra.mxu0 %v1213
  %1424 = vmatpush.bf16.msra.mxu0 %v1211
  %1425 = vmatpush.bf16.msra.mxu0 %v1209
  %1426 = vmatpush.bf16.msra.mxu0 %v1207
  %1427 = vmatmul.bf16.gmra.mxu0 %v891
  %v1428 = vpop.f32.mrf.mxu0
  %v1429 = vadd.f32 %v1410, %v1428
  %v1430 = vpop.f32.mrf.mxu0
  %v1431 = vadd.f32 %v1412, %v1430
  %1432 = vmatmul.bf16.gmra.mxu0 %v895
  %v1433 = vpop.f32.mrf.mxu0
  %v1434 = vadd.f32 %v1415, %v1433
  %v1435 = vpop.f32.mrf.mxu0
  %v1436 = vadd.f32 %v1417, %v1435
  %1437 = vdwg.mxu0
  %v1438 = vxor.u32 %v1353, 2147483648
  %v1439 = vxor.u32 %v1429, 2147483648
  %v1440 = vxor.u32 %v1355, 2147483648
  %v1441 = vxor.u32 %v1431, 2147483648
  %v1442 = vxor.u32 %v1358, 2147483648
  %v1443 = vxor.u32 %v1434, 2147483648
  %v1444 = vxor.u32 %v1360, 2147483648
  %v1445 = vxor.u32 %v1436, 2147483648
  %v1446 = vmul.f32 %v1438, 1.442695
  %v1447 = vpow.pop %v1446
  %v1448 = vmul.f32 %v1439, 1.442695
  %v1449 = vpow.pop %v1448
  %v1450 = vmul.f32 %v1440, 1.442695
  %v1451 = vpow.pop %v1450
  %v1452 = vmul.f32 %v1441, 1.442695
  %v1453 = vpow.pop %v1452
  %v1454 = vmul.f32 %v1442, 1.442695
  %v1455 = vpow.pop %v1454
  %v1456 = vmul.f32 %v1443, 1.442695
  %v1457 = vpow.pop %v1456
  %v1458 = vmul.f32 %v1444, 1.442695
  %v1459 = vpow.pop %v1458
  %v1460 = vmul.f32 %v1445, 1.442695
  %v1461 = vpow.pop %v1460
  %v1462 = vadd.f32 %v1447, 1.0
  %v1463 = vadd.f32 %v1449, 1.0
  %v1464 = vadd.f32 %v1451, 1.0
  %v1465 = vadd.f32 %v1453, 1.0
  %v1466 = vadd.f32 %v1455, 1.0
  %v1467 = vadd.f32 %v1457, 1.0
  %v1468 = vadd.f32 %v1459, 1.0
  %v1469 = vadd.f32 %v1461, 1.0
  %v1470 = vrcp.pop %v1462
  %v1471 = vmul.f32 %v1462, %v1470
  %v1472 = vsub.f32 1.0, %v1471
  %v1473 = vmul.f32 %v1470, %v1472
  %v1474 = vadd.f32 %v1470, %v1473
  %vm1475 = vweird.f32 %v1462
  %vm1476 = vweird.f32 %v1470
  %vm1477 = vmor %vm1475, %vm1476
  %v1478 = vsel %vm1477, %v1470, %v1474
  %v1479 = vand.u32 2147483647, %v1462
  %vm1480 = vcmp.eq.f32.partialorder %v1479, 8.507059e+37
  %v1481 = vand.u32 %v1462, 2147483648
  %v1482 = vor.u32 1.1754944e-38, %v1481
  %v1483 = vsel %vm1480, %v1482, %v1478
  %v1484 = vmul.f32 1.0, %v1483
  %v1485 = vrcp.pop %v1463
  %v1486 = vmul.f32 %v1463, %v1485
  %v1487 = vsub.f32 1.0, %v1486
  %v1488 = vmul.f32 %v1485, %v1487
  %v1489 = vadd.f32 %v1485, %v1488
  %vm1490 = vweird.f32 %v1463
  %vm1491 = vweird.f32 %v1485
  %vm1492 = vmor %vm1490, %vm1491
  %v1493 = vsel %vm1492, %v1485, %v1489
  %v1494 = vand.u32 2147483647, %v1463
  %vm1495 = vcmp.eq.f32.partialorder %v1494, 8.507059e+37
  %v1496 = vand.u32 %v1463, 2147483648
  %v1497 = vor.u32 1.1754944e-38, %v1496
  %v1498 = vsel %vm1495, %v1497, %v1493
  %v1499 = vmul.f32 1.0, %v1498
  %v1500 = vrcp.pop %v1464
  %v1501 = vmul.f32 %v1464, %v1500
  %v1502 = vsub.f32 1.0, %v1501
  %v1503 = vmul.f32 %v1500, %v1502
  %v1504 = vadd.f32 %v1500, %v1503
  %vm1505 = vweird.f32 %v1464
  %vm1506 = vweird.f32 %v1500
  %vm1507 = vmor %vm1505, %vm1506
  %v1508 = vsel %vm1507, %v1500, %v1504
  %v1509 = vand.u32 2147483647, %v1464
  %vm1510 = vcmp.eq.f32.partialorder %v1509, 8.507059e+37
  %v1511 = vand.u32 %v1464, 2147483648
  %v1512 = vor.u32 1.1754944e-38, %v1511
  %v1513 = vsel %vm1510, %v1512, %v1508
  %v1514 = vmul.f32 1.0, %v1513
  %v1515 = vrcp.pop %v1465
  %v1516 = vmul.f32 %v1465, %v1515
  %v1517 = vsub.f32 1.0, %v1516
  %v1518 = vmul.f32 %v1515, %v1517
  %v1519 = vadd.f32 %v1515, %v1518
  %vm1520 = vweird.f32 %v1465
  %vm1521 = vweird.f32 %v1515
  %vm1522 = vmor %vm1520, %vm1521
  %v1523 = vsel %vm1522, %v1515, %v1519
  %v1524 = vand.u32 2147483647, %v1465
  %vm1525 = vcmp.eq.f32.partialorder %v1524, 8.507059e+37
  %v1526 = vand.u32 %v1465, 2147483648
  %v1527 = vor.u32 1.1754944e-38, %v1526
  %v1528 = vsel %vm1525, %v1527, %v1523
  %v1529 = vmul.f32 1.0, %v1528
  %v1530 = vrcp.pop %v1466
  %v1531 = vmul.f32 %v1466, %v1530
  %v1532 = vsub.f32 1.0, %v1531
  %v1533 = vmul.f32 %v1530, %v1532
  %v1534 = vadd.f32 %v1530, %v1533
  %vm1535 = vweird.f32 %v1466
  %vm1536 = vweird.f32 %v1530
  %vm1537 = vmor %vm1535, %vm1536
  %v1538 = vsel %vm1537, %v1530, %v1534
  %v1539 = vand.u32 2147483647, %v1466
  %vm1540 = vcmp.eq.f32.partialorder %v1539, 8.507059e+37
  %v1541 = vand.u32 %v1466, 2147483648
  %v1542 = vor.u32 1.1754944e-38, %v1541
  %v1543 = vsel %vm1540, %v1542, %v1538
  %v1544 = vmul.f32 1.0, %v1543
  %v1545 = vrcp.pop %v1467
  %v1546 = vmul.f32 %v1467, %v1545
  %v1547 = vsub.f32 1.0, %v1546
  %v1548 = vmul.f32 %v1545, %v1547
  %v1549 = vadd.f32 %v1545, %v1548
  %vm1550 = vweird.f32 %v1467
  %vm1551 = vweird.f32 %v1545
  %vm1552 = vmor %vm1550, %vm1551
  %v1553 = vsel %vm1552, %v1545, %v1549
  %v1554 = vand.u32 2147483647, %v1467
  %vm1555 = vcmp.eq.f32.partialorder %v1554, 8.507059e+37
  %v1556 = vand.u32 %v1467, 2147483648
  %v1557 = vor.u32 1.1754944e-38, %v1556
  %v1558 = vsel %vm1555, %v1557, %v1553
  %v1559 = vmul.f32 1.0, %v1558
  %v1560 = vrcp.pop %v1468
  %v1561 = vmul.f32 %v1468, %v1560
  %v1562 = vsub.f32 1.0, %v1561
  %v1563 = vmul.f32 %v1560, %v1562
  %v1564 = vadd.f32 %v1560, %v1563
  %vm1565 = vweird.f32 %v1468
  %vm1566 = vweird.f32 %v1560
  %vm1567 = vmor %vm1565, %vm1566
  %v1568 = vsel %vm1567, %v1560, %v1564
  %v1569 = vand.u32 2147483647, %v1468
  %vm1570 = vcmp.eq.f32.partialorder %v1569, 8.507059e+37
  %v1571 = vand.u32 %v1468, 2147483648
  %v1572 = vor.u32 1.1754944e-38, %v1571
  %v1573 = vsel %vm1570, %v1572, %v1568
  %v1574 = vmul.f32 1.0, %v1573
  %v1575 = vrcp.pop %v1469
  %v1576 = vmul.f32 %v1469, %v1575
  %v1577 = vsub.f32 1.0, %v1576
  %v1578 = vmul.f32 %v1575, %v1577
  %v1579 = vadd.f32 %v1575, %v1578
  %vm1580 = vweird.f32 %v1469
  %vm1581 = vweird.f32 %v1575
  %vm1582 = vmor %vm1580, %vm1581
  %v1583 = vsel %vm1582, %v1575, %v1579
  %v1584 = vand.u32 2147483647, %v1469
  %vm1585 = vcmp.eq.f32.partialorder %v1584, 8.507059e+37
  %v1586 = vand.u32 %v1469, 2147483648
  %v1587 = vor.u32 1.1754944e-38, %v1586
  %v1588 = vsel %vm1585, %v1587, %v1583
  %v1589 = vmul.f32 1.0, %v1588
  %v1590 = vpack.c.bf16 %v1514, %v1484
  %v1591 = vpack.c.bf16 %v1529, %v1499
  %v1592 = vpack.c.bf16 %v1574, %v1544
  %v1593 = vpack.c.bf16 %v1589, %v1559
  %v1594 = vld [vmem:[%s5] sm:$0xf]
  %v1595 = vld [vmem:[%s5 + $0x4] sm:$0xf]
  %v1596 = vld [vmem:[%s5 + $0x8] sm:$0xf]
  %v1597 = vld [vmem:[%s5 + $0xc] sm:$0xf]
  %v1598 = vld [vmem:[%s5 + $0x10] sm:$0xf]
  %v1599 = vld [vmem:[%s5 + $0x14] sm:$0xf]
  %v1600 = vld [vmem:[%s5 + $0x18] sm:$0xf]
  %v1601 = vld [vmem:[%s5 + $0x1c] sm:$0xf]
  %v1602 = vld [vmem:[%s5 + $0x20] sm:$0xf]
  %v1603 = vld [vmem:[%s5 + $0x24] sm:$0xf]
  %v1604 = vld [vmem:[%s5 + $0x28] sm:$0xf]
  %v1605 = vld [vmem:[%s5 + $0x2c] sm:$0xf]
  %v1606 = vld [vmem:[%s5 + $0x30] sm:$0xf]
  %v1607 = vld [vmem:[%s5 + $0x34] sm:$0xf]
  %v1608 = vld [vmem:[%s5 + $0x38] sm:$0xf]
  %v1609 = vld [vmem:[%s5 + $0x3c] sm:$0xf]
  %v1610 = vld [vmem:[%s5 + $0x40] sm:$0xf]
  %v1611 = vld [vmem:[%s5 + $0x44] sm:$0xf]
  %v1612 = vld [vmem:[%s5 + $0x48] sm:$0xf]
  %v1613 = vld [vmem:[%s5 + $0x4c] sm:$0xf]
  %v1614 = vld [vmem:[%s5 + $0x50] sm:$0xf]
  %v1615 = vld [vmem:[%s5 + $0x54] sm:$0xf]
  %v1616 = vld [vmem:[%s5 + $0x58] sm:$0xf]
  %v1617 = vld [vmem:[%s5 + $0x5c] sm:$0xf]
  %v1618 = vld [vmem:[%s5 + $0x60] sm:$0xf]
  %v1619 = vld [vmem:[%s5 + $0x64] sm:$0xf]
  %v1620 = vld [vmem:[%s5 + $0x68] sm:$0xf]
  %v1621 = vld [vmem:[%s5 + $0x6c] sm:$0xf]
  %v1622 = vld [vmem:[%s5 + $0x70] sm:$0xf]
  %v1623 = vld [vmem:[%s5 + $0x74] sm:$0xf]
  %v1624 = vld [vmem:[%s5 + $0x78] sm:$0xf]
  %v1625 = vld [vmem:[%s5 + $0x7c] sm:$0xf]
  %v1626 = vld [vmem:[%s6] sm:$0x1]
  %v1628 = vperm.slane %v1626, 0
  %v1662 = vunpack.c.l.b16 %v1594
  %v1663 = vunpack.c.l.b16 %v1595
  %v1664 = vunpack.c.l.b16 %v1596
  %v1665 = vunpack.c.l.b16 %v1597
  %v1666 = vunpack.c.l.b16 %v1598
  %v1667 = vunpack.c.l.b16 %v1599
  %v1668 = vunpack.c.l.b16 %v1600
  %v1669 = vunpack.c.l.b16 %v1601
  %v1670 = vunpack.c.l.b16 %v1602
  %v1671 = vunpack.c.l.b16 %v1603
  %v1672 = vunpack.c.l.b16 %v1604
  %v1673 = vunpack.c.l.b16 %v1605
  %v1674 = vunpack.c.l.b16 %v1606
  %v1675 = vunpack.c.l.b16 %v1607
  %v1676 = vunpack.c.l.b16 %v1608
  %v1677 = vunpack.c.l.b16 %v1609
  %v1678 = vunpack.c.l.b16 %v1610
  %v1679 = vunpack.c.l.b16 %v1611
  %v1680 = vunpack.c.l.b16 %v1612
  %v1681 = vunpack.c.l.b16 %v1613
  %v1682 = vunpack.c.l.b16 %v1614
  %v1683 = vunpack.c.l.b16 %v1615
  %v1684 = vunpack.c.l.b16 %v1616
  %v1685 = vunpack.c.l.b16 %v1617
  %v1686 = vunpack.c.l.b16 %v1618
  %v1687 = vunpack.c.l.b16 %v1619
  %v1688 = vunpack.c.l.b16 %v1620
  %v1689 = vunpack.c.l.b16 %v1621
  %v1690 = vunpack.c.l.b16 %v1622
  %v1691 = vunpack.c.l.b16 %v1623
  %v1692 = vunpack.c.l.b16 %v1624
  %v1693 = vunpack.c.l.b16 %v1625
  %v1694 = vpack.c.b16 %v1663, %v1662
  %v1695 = vpack.c.b16 %v1665, %v1664
  %v1696 = vpack.c.b16 %v1667, %v1666
  %v1697 = vpack.c.b16 %v1669, %v1668
  %v1698 = vpack.c.b16 %v1671, %v1670
  %v1699 = vpack.c.b16 %v1673, %v1672
  %v1700 = vpack.c.b16 %v1675, %v1674
  %v1701 = vpack.c.b16 %v1677, %v1676
  %v1702 = vpack.c.b16 %v1679, %v1678
  %v1703 = vpack.c.b16 %v1681, %v1680
  %v1704 = vpack.c.b16 %v1683, %v1682
  %v1705 = vpack.c.b16 %v1685, %v1684
  %v1706 = vpack.c.b16 %v1687, %v1686
  %v1707 = vpack.c.b16 %v1689, %v1688
  %v1708 = vpack.c.b16 %v1691, %v1690
  %v1709 = vpack.c.b16 %v1693, %v1692
  %1726 = vmatpush.bf16.msra.mxu0 %v1701
  %1727 = vmatpush.bf16.msra.mxu0 %v1700
  %1728 = vmatpush.bf16.msra.mxu0 %v1699
  %1729 = vmatpush.bf16.msra.mxu0 %v1698
  %1730 = vmatpush.bf16.msra.mxu0 %v1697
  %1731 = vmatpush.bf16.msra.mxu0 %v1696
  %1732 = vmatpush.bf16.msra.mxu0 %v1695
  %1733 = vmatpush.bf16.msra.mxu0 %v1694
  %1734 = vmatmul.bf16.gmra.mxu0 %v1590
  %v1735 = vpop.f32.mrf.mxu0
  %v1736 = vadd.f32 %v1628, %v1735
  %v1737 = vpop.f32.mrf.mxu0
  %v1738 = vadd.f32 %v1628, %v1737
  %1739 = vmatmul.bf16.gmra.mxu0 %v1592
  %v1740 = vpop.f32.mrf.mxu0
  %v1741 = vadd.f32 %v1628, %v1740
  %v1742 = vpop.f32.mrf.mxu0
  %v1743 = vadd.f32 %v1628, %v1742
  %1744 = vdwg.mxu0
  %1745 = vmatpush.bf16.msra.mxu0 %v1709
  %1746 = vmatpush.bf16.msra.mxu0 %v1708
  %1747 = vmatpush.bf16.msra.mxu0 %v1707
  %1748 = vmatpush.bf16.msra.mxu0 %v1706
  %1749 = vmatpush.bf16.msra.mxu0 %v1705
  %1750 = vmatpush.bf16.msra.mxu0 %v1704
  %1751 = vmatpush.bf16.msra.mxu0 %v1703
  %1752 = vmatpush.bf16.msra.mxu0 %v1702
  %1753 = vmatmul.bf16.gmra.mxu0 %v1591
  %v1754 = vpop.f32.mrf.mxu0
  %v1755 = vadd.f32 %v1736, %v1754
  %v1756 = vpop.f32.mrf.mxu0
  %v1757 = vadd.f32 %v1738, %v1756
  %1758 = vmatmul.bf16.gmra.mxu0 %v1593
  %v1759 = vpop.f32.mrf.mxu0
  %v1760 = vadd.f32 %v1741, %v1759
  %v1761 = vpop.f32.mrf.mxu0
  %v1762 = vadd.f32 %v1743, %v1761
  %1763 = vdwg.mxu0
  %1764 = vst [vmem:[%s7] sm:$0xff] %v1755
  %1765 = vst [vmem:[%s7 + $0x8] sm:$0xff] %v1757
  %1766 = vst [vmem:[%s7 + $0x10] sm:$0xff] %v1760
  %1767 = vst [vmem:[%s7 + $0x18] sm:$0xff] %v1762
  // Predicated region
  $region30: #{simple_mlp_forward.1} parent=0 // pred_check
    _
  $region31: #{simple_mlp_forward.1} parent=0 // pred_check_branch
    %1769 = sbr.rel (0) target = $region33
  $region32: #{simple_mlp_forward.1} parent=0 // pred_region
    _
  $region33: #{simple_mlp_forward.1} parent=0 // pred_fallthru
    _
  // Predicated region
  $region34: #{simple_mlp_forward.1} parent=0 // pred_check
    _
  $region35: #{simple_mlp_forward.1} parent=0 // pred_check_branch
    %1771 = sbr.rel (0) target = $region37
  $region36: #{simple_mlp_forward.1} parent=0 // pred_region
    _
  $region37: #{simple_mlp_forward.1} parent=0 // pred_fallthru
    _

</llo_original>
